<compile_context>
chip_gen: v5e
topology: v5e:2x2
jax: 0.10.0
libtpu: 0.0.40
codegen_flags: <defaults>
</compile_context>

<pallas_src>
import math

import jax
import jax.numpy as jnp
from jax.experimental import pallas as pl
from jax.experimental.pallas import tpu as pltpu

# ----------------------------- model config ---------------------------------
VOCAB = 100
HIDDEN = 32
NUM_HEADS = 2
HEAD_DIM = HIDDEN // NUM_HEADS
FFN = 64
NUM_LAYERS = 2
MAX_POS = 16
LN_EPS = 1e-5
POOL_PAD = 128          # lane-dense width for the single HBM output store


# ----------------------------- fused Pallas kernel --------------------------
def _encoder_kernel(x_ref, bias_ref, eg_ref, eb_ref,
                    qkvw_ref, qkvb_ref, ow_ref, ob_ref,
                    ln1g_ref, ln1b_ref, iw_ref, ib_ref,
                    outw_ref, outb_ref, ln2g_ref, ln2b_ref,
                    pw_ref, pb_ref, o_ref):
    """One grid step == one batch element; the whole encoder stays in VMEM."""
    f32 = jnp.float32
    S = x_ref.shape[1]

    def ln(v, g, b):
        mu = jnp.mean(v, axis=-1, keepdims=True)
        var = jnp.mean(jnp.square(v - mu), axis=-1, keepdims=True)
        return (v - mu) * jax.lax.rsqrt(var + LN_EPS) * g + b

    x = ln(x_ref[0], eg_ref[...], eb_ref[...])        # (S, H) embedding LayerNorm
    bias = bias_ref[0]                                # (1, S) additive mask bias
    scale = 1.0 / math.sqrt(HEAD_DIM)

    for li in range(NUM_LAYERS):                      # static unroll (2 layers)
        qkv_w = qkvw_ref[li]                          # (H, 3H) fused QKV weight
        qkv_b = qkvb_ref[li]                          # (1, 3H)
        o_w = ow_ref[li]                              # (H, H)
        o_b = ob_ref[li]                              # (1, H)

        qkv = jnp.dot(x, qkv_w, preferred_element_type=f32) + qkv_b      # (S, 3H)

        acc = jnp.zeros((S, HIDDEN), f32)
        for h in range(NUM_HEADS):                    # per-head attention (2-D matmuls)
            lo, hi = h * HEAD_DIM, (h + 1) * HEAD_DIM
            qh = qkv[:, lo:hi]
            kh = qkv[:, HIDDEN + lo:HIDDEN + hi]
            vh = qkv[:, 2 * HIDDEN + lo:2 * HIDDEN + hi]
            s = jax.lax.dot_general(qh, kh, (((1,), (1,)), ((), ())),
                                    preferred_element_type=f32) * scale  # (S, S)
            s = s + bias                              # HF-style (1-mask)*-1e4 bias
            m = jnp.max(s, axis=-1, keepdims=True)
            e = jnp.exp(s - m)
            p = e * pl.reciprocal(jnp.sum(e, axis=-1, keepdims=True), approx=True)
            ctx = jnp.dot(p, vh, preferred_element_type=f32)             # (S, HD)
            # fold the per-head slice of the output projection in directly
            acc = acc + jnp.dot(ctx, o_w[lo:hi, :], preferred_element_type=f32)
        x = ln(x + acc + o_b, ln1g_ref[li], ln1b_ref[li])                # residual + LN1

        inter = jnp.dot(x, iw_ref[li], preferred_element_type=f32) + ib_ref[li]
        # TODO(synk): RoBERTa uses the exact erf GELU; tanh approximation used here.
        inter = jax.nn.gelu(inter, approximate=True)
        ffn = jnp.dot(inter, outw_ref[li], preferred_element_type=f32) + outb_ref[li]
        x = ln(x + ffn, ln2g_ref[li], ln2b_ref[li])                      # residual + LN2

    cls = x[0:1, :]                                   # CLS token (pooler input)
    pooled = jnp.tanh(jnp.dot(cls, pw_ref[...], preferred_element_type=f32)
                      + pb_ref[...])                  # (1, POOL_PAD)
    o_ref[0] = pooled                                 # lane-dense (128-wide) store


def _whole(shape):
    zeros = (0,) * len(shape)
    return pl.BlockSpec(shape, lambda b: zeros)


def fused_encoder(x_emb, bias, emb_ln_g, emb_ln_b, stack, pool_w, pool_b):
    B, S, H = x_emb.shape
    out = pl.pallas_call(
        _encoder_kernel,
        grid=(B,),
        in_specs=[
            pl.BlockSpec((1, S, H), lambda b: (b, 0, 0)),     # activations (per batch)
            pl.BlockSpec((1, 1, S), lambda b: (b, 0, 0)),     # mask bias (per batch)
            _whole(emb_ln_g.shape), _whole(emb_ln_b.shape),
            _whole(stack["qkv_w"].shape), _whole(stack["qkv_b"].shape),
            _whole(stack["o_w"].shape), _whole(stack["o_b"].shape),
            _whole(stack["ln1_g"].shape), _whole(stack["ln1_b"].shape),
            _whole(stack["i_w"].shape), _whole(stack["i_b"].shape),
            _whole(stack["out_w"].shape), _whole(stack["out_b"].shape),
            _whole(stack["ln2_g"].shape), _whole(stack["ln2_b"].shape),
            _whole(pool_w.shape), _whole(pool_b.shape),
        ],
        out_specs=pl.BlockSpec((1, 1, POOL_PAD), lambda b: (b, 0, 0)),
        out_shape=jax.ShapeDtypeStruct((B, 1, POOL_PAD), jnp.float32),
        compiler_params=pltpu.CompilerParams(dimension_semantics=("parallel",)),
    )(x_emb, bias, emb_ln_g, emb_ln_b,
      stack["qkv_w"], stack["qkv_b"], stack["o_w"], stack["o_b"],
      stack["ln1_g"], stack["ln1_b"], stack["i_w"], stack["i_b"],
      stack["out_w"], stack["out_b"], stack["ln2_g"], stack["ln2_b"],
      pool_w, pool_b)
    return out[:, 0, :HIDDEN]


# ----------------------------- params / glue ---------------------------------
def _dense_init(key, shape, scale=0.02):
    return scale * jax.random.normal(key, shape, dtype=jnp.float32)


def init_encoder_params(key):
    keys = jax.random.split(key, 4 + NUM_LAYERS)
    stack = {k: [] for k in ("qkv_w", "qkv_b", "o_w", "o_b", "ln1_g", "ln1_b",
                             "i_w", "i_b", "out_w", "out_b", "ln2_g", "ln2_b")}
    for li in range(NUM_LAYERS):
        lk = jax.random.split(keys[4 + li], 6)
        stack["qkv_w"].append(jnp.concatenate(
            [_dense_init(lk[0], (HIDDEN, HIDDEN)),
             _dense_init(lk[1], (HIDDEN, HIDDEN)),
             _dense_init(lk[2], (HIDDEN, HIDDEN))], axis=1))        # fused QKV
        stack["qkv_b"].append(jnp.zeros((1, 3 * HIDDEN), jnp.float32))
        stack["o_w"].append(_dense_init(lk[3], (HIDDEN, HIDDEN)))
        stack["o_b"].append(jnp.zeros((1, HIDDEN), jnp.float32))
        stack["ln1_g"].append(jnp.ones((1, HIDDEN), jnp.float32))
        stack["ln1_b"].append(jnp.zeros((1, HIDDEN), jnp.float32))
        stack["i_w"].append(_dense_init(lk[4], (HIDDEN, FFN)))
        stack["i_b"].append(jnp.zeros((1, FFN), jnp.float32))
        stack["out_w"].append(_dense_init(lk[5], (FFN, HIDDEN)))
        stack["out_b"].append(jnp.zeros((1, HIDDEN), jnp.float32))
        stack["ln2_g"].append(jnp.ones((1, HIDDEN), jnp.float32))
        stack["ln2_b"].append(jnp.zeros((1, HIDDEN), jnp.float32))
    stack = {k: jnp.stack(v) for k, v in stack.items()}

    pool_w = _dense_init(keys[3], (HIDDEN, HIDDEN))
    # pad pooler output to lane width 128 so the single HBM store is lane-dense
    pool_w = jnp.pad(pool_w, ((0, 0), (0, POOL_PAD - HIDDEN)))
    pool_b = jnp.zeros((1, POOL_PAD), jnp.float32)

    return {
        "embeddings": {
            "word": _dense_init(keys[0], (VOCAB, HIDDEN)),
            "pos": _dense_init(keys[1], (MAX_POS, HIDDEN)),
            "tok": _dense_init(keys[2], (1, HIDDEN)),
            "ln_g": jnp.ones((1, HIDDEN), jnp.float32),
            "ln_b": jnp.zeros((1, HIDDEN), jnp.float32),
        },
        "stack": stack,
        "pooler": {"w": pool_w, "b": pool_b},
    }


def _encode_impl(params, input_ids, attention_mask):
    """RoBERTa-like encoder; returns the pooler output (== model(...)[1])."""
    B, S = input_ids.shape
    emb = params["embeddings"]
    x = jnp.take(emb["word"], input_ids, axis=0)                  # gather: glue
    # TODO(synk): HF RoBERTa offsets position ids by padding_idx+1; 0..S-1 used here.
    x = x + emb["pos"][:S][None, :, :] + emb["tok"][0][None, None, :]
    bias = (1.0 - attention_mask.astype(jnp.float32))[:, None, :] * -10000.0  # (B,1,S)
    return fused_encoder(x, bias, emb["ln_g"], emb["ln_b"], params["stack"],
                         params["pooler"]["w"], params["pooler"]["b"])


encode = jax.jit(_encode_impl)


class BiEncoderModelJAX:
    """JAX/Pallas port of BiEncoderModel (query + key RoBERTa-style encoders)."""

    def __init__(self, key):
        kq, kk, kh = jax.random.split(key, 3)
        self.params_q = init_encoder_params(kq)
        self.params_k = init_encoder_params(kk)
        # prediction_head mirrors the PyTorch module but (as in the reference)
        # is never applied inside forward().
        self.prediction_head = {
            "w": _dense_init(kh, (HIDDEN, HIDDEN)),
            "b": jnp.zeros((1, HIDDEN), jnp.float32),
        }

    def get_hidden_size(self):
        return HIDDEN

    def forward(self, is_code_key, input_ids, attention_mask):
        if is_code_key:
            # torch.no_grad() equivalent: block gradients through the key encoder.
            return jax.lax.stop_gradient(
                encode(self.params_k, input_ids, attention_mask))
        return encode(self.params_q, input_ids, attention_mask)


# --------------------------------- main ---------------------------------------
if __name__ == "__main__":
    key = jax.random.PRNGKey(0)
    k_params, k_ids = jax.random.split(key)

    model = BiEncoderModelJAX(k_params)

    B, S = 2, 8
    input_ids = jax.random.randint(k_ids, (B, S), 0, VOCAB, dtype=jnp.int32)
    attention_mask = jnp.ones((B, S), dtype=jnp.int32).at[1, 6:].set(0)

    # query branch (is_code_key=False) -> model_q pooler output
    query = model.forward(False, input_ids, attention_mask)
    # key branch (is_code_key=True) -> model_k pooler output (no grad)
    key_out = model.forward(True, input_ids, attention_mask)

    jax.block_until_ready((query, key_out))
    assert query.shape == (B, HIDDEN) and key_out.shape == (B, HIDDEN)
    assert bool(jnp.all(jnp.isfinite(query))) and bool(jnp.all(jnp.isfinite(key_out)))
    print("KERNEL_OK")
</pallas_src>

<mosaic_0001>
module attributes {stable_mosaic.version = 11 : i64} {
  func.func @_encoder_kernel(%arg0: i32, %arg1: memref<1x8x32xf32, #tpu.memory_space<vmem>>, %arg2: memref<1x1x8xf32, #tpu.memory_space<vmem>>, %arg3: memref<1x32xf32, #tpu.memory_space<vmem>>, %arg4: memref<1x32xf32, #tpu.memory_space<vmem>>, %arg5: memref<2x32x96xf32, #tpu.memory_space<vmem>>, %arg6: memref<2x1x96xf32, #tpu.memory_space<vmem>>, %arg7: memref<2x32x32xf32, #tpu.memory_space<vmem>>, %arg8: memref<2x1x32xf32, #tpu.memory_space<vmem>>, %arg9: memref<2x1x32xf32, #tpu.memory_space<vmem>>, %arg10: memref<2x1x32xf32, #tpu.memory_space<vmem>>, %arg11: memref<2x32x64xf32, #tpu.memory_space<vmem>>, %arg12: memref<2x1x64xf32, #tpu.memory_space<vmem>>, %arg13: memref<2x64x32xf32, #tpu.memory_space<vmem>>, %arg14: memref<2x1x32xf32, #tpu.memory_space<vmem>>, %arg15: memref<2x1x32xf32, #tpu.memory_space<vmem>>, %arg16: memref<2x1x32xf32, #tpu.memory_space<vmem>>, %arg17: memref<32x128xf32, #tpu.memory_space<vmem>>, %arg18: memref<1x128xf32, #tpu.memory_space<vmem>>, %arg19: memref<1x1x128xf32, #tpu.memory_space<vmem>>) attributes {dimension_semantics = [#tpu.dimension_semantics<parallel>], iteration_bounds = array<i64: 2>, scalar_prefetch = 0 : i64, scratch_operands = 0 : i64, tpu.core_type = #tpu.core_type<tc>, window_params = [{transform_indices = @transform_0, window_bounds = array<i64: 1, 8, 32>}, {transform_indices = @transform_1, window_bounds = array<i64: 1, 1, 8>}, {pipeline_mode = #tpu.pipeline_mode<synchronous>, transform_indices = @transform_2, window_bounds = array<i64: 1, 32>}, {pipeline_mode = #tpu.pipeline_mode<synchronous>, transform_indices = @transform_3, window_bounds = array<i64: 1, 32>}, {pipeline_mode = #tpu.pipeline_mode<synchronous>, transform_indices = @transform_4, window_bounds = array<i64: 2, 32, 96>}, {pipeline_mode = #tpu.pipeline_mode<synchronous>, transform_indices = @transform_5, window_bounds = array<i64: 2, 1, 96>}, {pipeline_mode = #tpu.pipeline_mode<synchronous>, transform_indices = @transform_6, window_bounds = array<i64: 2, 32, 32>}, {pipeline_mode = #tpu.pipeline_mode<synchronous>, transform_indices = @transform_7, window_bounds = array<i64: 2, 1, 32>}, {pipeline_mode = #tpu.pipeline_mode<synchronous>, transform_indices = @transform_8, window_bounds = array<i64: 2, 1, 32>}, {pipeline_mode = #tpu.pipeline_mode<synchronous>, transform_indices = @transform_9, window_bounds = array<i64: 2, 1, 32>}, {pipeline_mode = #tpu.pipeline_mode<synchronous>, transform_indices = @transform_10, window_bounds = array<i64: 2, 32, 64>}, {pipeline_mode = #tpu.pipeline_mode<synchronous>, transform_indices = @transform_11, window_bounds = array<i64: 2, 1, 64>}, {pipeline_mode = #tpu.pipeline_mode<synchronous>, transform_indices = @transform_12, window_bounds = array<i64: 2, 64, 32>}, {pipeline_mode = #tpu.pipeline_mode<synchronous>, transform_indices = @transform_13, window_bounds = array<i64: 2, 1, 32>}, {pipeline_mode = #tpu.pipeline_mode<synchronous>, transform_indices = @transform_14, window_bounds = array<i64: 2, 1, 32>}, {pipeline_mode = #tpu.pipeline_mode<synchronous>, transform_indices = @transform_15, window_bounds = array<i64: 2, 1, 32>}, {pipeline_mode = #tpu.pipeline_mode<synchronous>, transform_indices = @transform_16, window_bounds = array<i64: 32, 128>}, {pipeline_mode = #tpu.pipeline_mode<synchronous>, transform_indices = @transform_17, window_bounds = array<i64: 1, 128>}, {transform_indices = @transform_18, window_bounds = array<i64: 1, 1, 128>}]} {
    %c0 = arith.constant 0 : index
    %c0_0 = arith.constant 0 : index
    %c0_1 = arith.constant 0 : index
    %0 = vector.load %arg1[%c0, %c0_0, %c0_1] : memref<1x8x32xf32, #tpu.memory_space<vmem>>, vector<1x8x32xf32>
    %1 = vector.shape_cast %0 : vector<1x8x32xf32> to vector<8x32xf32>
    %c0_2 = arith.constant 0 : index
    %c0_3 = arith.constant 0 : index
    %2 = vector.load %arg3[%c0_2, %c0_3] : memref<1x32xf32, #tpu.memory_space<vmem>>, vector<1x32xf32>
    %c0_4 = arith.constant 0 : index
    %c0_5 = arith.constant 0 : index
    %3 = vector.load %arg4[%c0_4, %c0_5] : memref<1x32xf32, #tpu.memory_space<vmem>>, vector<1x32xf32>
    %cst = arith.constant dense<0.000000e+00> : vector<8xf32>
    %4 = vector.multi_reduction <add>, %1, %cst [1] : vector<8x32xf32> to vector<8xf32>
    %5 = vector.shape_cast %4 : vector<8xf32> to vector<8x1xf32>
    %cst_6 = arith.constant 3.200000e+01 : f32
    %6 = vector.broadcast %cst_6 : f32 to vector<8x1xf32>
    %7 = arith.divf %5, %6 : vector<8x1xf32>
    %8 = vector.broadcast %7 : vector<8x1xf32> to vector<8x32xf32>
    %9 = arith.subf %1, %8 : vector<8x32xf32>
    %10 = arith.mulf %9, %9 : vector<8x32xf32>
    %cst_7 = arith.constant dense<0.000000e+00> : vector<8xf32>
    %11 = vector.multi_reduction <add>, %10, %cst_7 [1] : vector<8x32xf32> to vector<8xf32>
    %12 = vector.shape_cast %11 : vector<8xf32> to vector<8x1xf32>
    %cst_8 = arith.constant 3.200000e+01 : f32
    %13 = vector.broadcast %cst_8 : f32 to vector<8x1xf32>
    %14 = arith.divf %12, %13 : vector<8x1xf32>
    %15 = vector.broadcast %7 : vector<8x1xf32> to vector<8x32xf32>
    %16 = arith.subf %1, %15 : vector<8x32xf32>
    %cst_9 = arith.constant 9.99999974E-6 : f32
    %17 = vector.broadcast %cst_9 : f32 to vector<8x1xf32>
    %18 = arith.addf %14, %17 : vector<8x1xf32>
    %19 = math.rsqrt %18 : vector<8x1xf32>
    %20 = vector.broadcast %19 : vector<8x1xf32> to vector<8x32xf32>
    %21 = arith.mulf %16, %20 : vector<8x32xf32>
    %22 = vector.broadcast %2 : vector<1x32xf32> to vector<8x32xf32>
    %23 = arith.mulf %21, %22 : vector<8x32xf32>
    %24 = vector.broadcast %3 : vector<1x32xf32> to vector<8x32xf32>
    %25 = arith.addf %23, %24 : vector<8x32xf32>
    %c0_10 = arith.constant 0 : index
    %c0_11 = arith.constant 0 : index
    %c0_12 = arith.constant 0 : index
    %26 = vector.load %arg2[%c0_10, %c0_11, %c0_12] : memref<1x1x8xf32, #tpu.memory_space<vmem>>, vector<1x1x8xf32>
    %27 = vector.shape_cast %26 : vector<1x1x8xf32> to vector<1x8xf32>
    %c0_13 = arith.constant 0 : index
    %c0_14 = arith.constant 0 : index
    %c0_15 = arith.constant 0 : index
    %28 = vector.load %arg5[%c0_13, %c0_14, %c0_15] : memref<2x32x96xf32, #tpu.memory_space<vmem>>, vector<1x32x96xf32>
    %29 = vector.shape_cast %28 : vector<1x32x96xf32> to vector<32x96xf32>
    %c0_16 = arith.constant 0 : index
    %c0_17 = arith.constant 0 : index
    %c0_18 = arith.constant 0 : index
    %30 = vector.load %arg6[%c0_16, %c0_17, %c0_18] : memref<2x1x96xf32, #tpu.memory_space<vmem>>, vector<1x1x96xf32>
    %31 = vector.shape_cast %30 : vector<1x1x96xf32> to vector<1x96xf32>
    %c0_19 = arith.constant 0 : index
    %c0_20 = arith.constant 0 : index
    %c0_21 = arith.constant 0 : index
    %32 = vector.load %arg7[%c0_19, %c0_20, %c0_21] : memref<2x32x32xf32, #tpu.memory_space<vmem>>, vector<1x32x32xf32>
    %33 = vector.shape_cast %32 : vector<1x32x32xf32> to vector<32x32xf32>
    %c0_22 = arith.constant 0 : index
    %c0_23 = arith.constant 0 : index
    %c0_24 = arith.constant 0 : index
    %34 = vector.load %arg8[%c0_22, %c0_23, %c0_24] : memref<2x1x32xf32, #tpu.memory_space<vmem>>, vector<1x1x32xf32>
    %35 = vector.shape_cast %34 : vector<1x1x32xf32> to vector<1x32xf32>
    %cst_25 = arith.constant dense<0.000000e+00> : vector<8x96xf32>
    %36 = tpu.matmul %25, %29, %cst_25 {dimension_numbers = #tpu.dot_dimension_numbers<[1], [0], [0], [1], [0, 0, 1, 1], [], []>} : vector<8x32xf32>, vector<32x96xf32>, vector<8x96xf32> -> vector<8x96xf32>
    %37 = vector.broadcast %31 : vector<1x96xf32> to vector<8x96xf32>
    %38 = arith.addf %36, %37 : vector<8x96xf32>
    %cst_26 = arith.constant 0.000000e+00 : f32
    %39 = vector.broadcast %cst_26 : f32 to vector<8x32xf32>
    %40 = vector.extract_strided_slice %38 {offsets = [0, 0], sizes = [8, 16], strides = [1, 1]} : vector<8x96xf32> to vector<8x16xf32>
    %41 = vector.extract_strided_slice %38 {offsets = [0, 32], sizes = [8, 16], strides = [1, 1]} : vector<8x96xf32> to vector<8x16xf32>
    %42 = vector.extract_strided_slice %38 {offsets = [0, 64], sizes = [8, 16], strides = [1, 1]} : vector<8x96xf32> to vector<8x16xf32>
    %cst_27 = arith.constant dense<0.000000e+00> : vector<8x8xf32>
    %43 = tpu.matmul %40, %41, %cst_27 {dimension_numbers = #tpu.dot_dimension_numbers<[1], [1], [0], [0], [0, 0, 1, 0], [], []>} : vector<8x16xf32>, vector<8x16xf32>, vector<8x8xf32> -> vector<8x8xf32>
    %cst_28 = arith.constant 2.500000e-01 : f32
    %44 = vector.broadcast %cst_28 : f32 to vector<8x8xf32>
    %45 = arith.mulf %43, %44 : vector<8x8xf32>
    %46 = vector.broadcast %27 : vector<1x8xf32> to vector<8x8xf32>
    %47 = arith.addf %45, %46 : vector<8x8xf32>
    %cst_29 = arith.constant dense<0xFF800000> : vector<8xf32>
    %48 = vector.multi_reduction <maximumf>, %47, %cst_29 [1] : vector<8x8xf32> to vector<8xf32>
    %49 = vector.shape_cast %48 : vector<8xf32> to vector<8x1xf32>
    %50 = vector.broadcast %49 : vector<8x1xf32> to vector<8x8xf32>
    %51 = arith.subf %47, %50 : vector<8x8xf32>
    %52 = math.exp %51 : vector<8x8xf32>
    %cst_30 = arith.constant dense<0.000000e+00> : vector<8xf32>
    %53 = vector.multi_reduction <add>, %52, %cst_30 [1] : vector<8x8xf32> to vector<8xf32>
    %54 = vector.shape_cast %53 : vector<8xf32> to vector<8x1xf32>
    %55 = tpu.reciprocal %54 {approx = true} : vector<8x1xf32> -> vector<8x1xf32>
    %56 = vector.broadcast %55 : vector<8x1xf32> to vector<8x8xf32>
    %57 = arith.mulf %52, %56 : vector<8x8xf32>
    %cst_31 = arith.constant dense<0.000000e+00> : vector<8x16xf32>
    %58 = tpu.matmul %57, %42, %cst_31 {dimension_numbers = #tpu.dot_dimension_numbers<[1], [0], [0], [1], [0, 0, 1, 1], [], []>} : vector<8x8xf32>, vector<8x16xf32>, vector<8x16xf32> -> vector<8x16xf32>
    %59 = vector.extract_strided_slice %33 {offsets = [0, 0], sizes = [16, 32], strides = [1, 1]} : vector<32x32xf32> to vector<16x32xf32>
    %cst_32 = arith.constant dense<0.000000e+00> : vector<8x32xf32>
    %60 = tpu.matmul %58, %59, %cst_32 {dimension_numbers = #tpu.dot_dimension_numbers<[1], [0], [0], [1], [0, 0, 1, 1], [], []>} : vector<8x16xf32>, vector<16x32xf32>, vector<8x32xf32> -> vector<8x32xf32>
    %61 = arith.addf %39, %60 : vector<8x32xf32>
    %62 = vector.extract_strided_slice %38 {offsets = [0, 16], sizes = [8, 16], strides = [1, 1]} : vector<8x96xf32> to vector<8x16xf32>
    %63 = vector.extract_strided_slice %38 {offsets = [0, 48], sizes = [8, 16], strides = [1, 1]} : vector<8x96xf32> to vector<8x16xf32>
    %64 = vector.extract_strided_slice %38 {offsets = [0, 80], sizes = [8, 16], strides = [1, 1]} : vector<8x96xf32> to vector<8x16xf32>
    %cst_33 = arith.constant dense<0.000000e+00> : vector<8x8xf32>
    %65 = tpu.matmul %62, %63, %cst_33 {dimension_numbers = #tpu.dot_dimension_numbers<[1], [1], [0], [0], [0, 0, 1, 0], [], []>} : vector<8x16xf32>, vector<8x16xf32>, vector<8x8xf32> -> vector<8x8xf32>
    %cst_34 = arith.constant 2.500000e-01 : f32
    %66 = vector.broadcast %cst_34 : f32 to vector<8x8xf32>
    %67 = arith.mulf %65, %66 : vector<8x8xf32>
    %68 = vector.broadcast %27 : vector<1x8xf32> to vector<8x8xf32>
    %69 = arith.addf %67, %68 : vector<8x8xf32>
    %cst_35 = arith.constant dense<0xFF800000> : vector<8xf32>
    %70 = vector.multi_reduction <maximumf>, %69, %cst_35 [1] : vector<8x8xf32> to vector<8xf32>
    %71 = vector.shape_cast %70 : vector<8xf32> to vector<8x1xf32>
    %72 = vector.broadcast %71 : vector<8x1xf32> to vector<8x8xf32>
    %73 = arith.subf %69, %72 : vector<8x8xf32>
    %74 = math.exp %73 : vector<8x8xf32>
    %cst_36 = arith.constant dense<0.000000e+00> : vector<8xf32>
    %75 = vector.multi_reduction <add>, %74, %cst_36 [1] : vector<8x8xf32> to vector<8xf32>
    %76 = vector.shape_cast %75 : vector<8xf32> to vector<8x1xf32>
    %77 = tpu.reciprocal %76 {approx = true} : vector<8x1xf32> -> vector<8x1xf32>
    %78 = vector.broadcast %77 : vector<8x1xf32> to vector<8x8xf32>
    %79 = arith.mulf %74, %78 : vector<8x8xf32>
    %cst_37 = arith.constant dense<0.000000e+00> : vector<8x16xf32>
    %80 = tpu.matmul %79, %64, %cst_37 {dimension_numbers = #tpu.dot_dimension_numbers<[1], [0], [0], [1], [0, 0, 1, 1], [], []>} : vector<8x8xf32>, vector<8x16xf32>, vector<8x16xf32> -> vector<8x16xf32>
    %81 = vector.extract_strided_slice %33 {offsets = [16, 0], sizes = [16, 32], strides = [1, 1]} : vector<32x32xf32> to vector<16x32xf32>
    %cst_38 = arith.constant dense<0.000000e+00> : vector<8x32xf32>
    %82 = tpu.matmul %80, %81, %cst_38 {dimension_numbers = #tpu.dot_dimension_numbers<[1], [0], [0], [1], [0, 0, 1, 1], [], []>} : vector<8x16xf32>, vector<16x32xf32>, vector<8x32xf32> -> vector<8x32xf32>
    %83 = arith.addf %61, %82 : vector<8x32xf32>
    %84 = arith.addf %25, %83 : vector<8x32xf32>
    %85 = vector.broadcast %35 : vector<1x32xf32> to vector<8x32xf32>
    %86 = arith.addf %84, %85 : vector<8x32xf32>
    %c0_39 = arith.constant 0 : index
    %c0_40 = arith.constant 0 : index
    %c0_41 = arith.constant 0 : index
    %87 = vector.load %arg9[%c0_39, %c0_40, %c0_41] : memref<2x1x32xf32, #tpu.memory_space<vmem>>, vector<1x1x32xf32>
    %88 = vector.shape_cast %87 : vector<1x1x32xf32> to vector<1x32xf32>
    %c0_42 = arith.constant 0 : index
    %c0_43 = arith.constant 0 : index
    %c0_44 = arith.constant 0 : index
    %89 = vector.load %arg10[%c0_42, %c0_43, %c0_44] : memref<2x1x32xf32, #tpu.memory_space<vmem>>, vector<1x1x32xf32>
    %90 = vector.shape_cast %89 : vector<1x1x32xf32> to vector<1x32xf32>
    %cst_45 = arith.constant dense<0.000000e+00> : vector<8xf32>
    %91 = vector.multi_reduction <add>, %86, %cst_45 [1] : vector<8x32xf32> to vector<8xf32>
    %92 = vector.shape_cast %91 : vector<8xf32> to vector<8x1xf32>
    %cst_46 = arith.constant 3.200000e+01 : f32
    %93 = vector.broadcast %cst_46 : f32 to vector<8x1xf32>
    %94 = arith.divf %92, %93 : vector<8x1xf32>
    %95 = vector.broadcast %94 : vector<8x1xf32> to vector<8x32xf32>
    %96 = arith.subf %86, %95 : vector<8x32xf32>
    %97 = arith.mulf %96, %96 : vector<8x32xf32>
    %cst_47 = arith.constant dense<0.000000e+00> : vector<8xf32>
    %98 = vector.multi_reduction <add>, %97, %cst_47 [1] : vector<8x32xf32> to vector<8xf32>
    %99 = vector.shape_cast %98 : vector<8xf32> to vector<8x1xf32>
    %cst_48 = arith.constant 3.200000e+01 : f32
    %100 = vector.broadcast %cst_48 : f32 to vector<8x1xf32>
    %101 = arith.divf %99, %100 : vector<8x1xf32>
    %102 = vector.broadcast %94 : vector<8x1xf32> to vector<8x32xf32>
    %103 = arith.subf %86, %102 : vector<8x32xf32>
    %cst_49 = arith.constant 9.99999974E-6 : f32
    %104 = vector.broadcast %cst_49 : f32 to vector<8x1xf32>
    %105 = arith.addf %101, %104 : vector<8x1xf32>
    %106 = math.rsqrt %105 : vector<8x1xf32>
    %107 = vector.broadcast %106 : vector<8x1xf32> to vector<8x32xf32>
    %108 = arith.mulf %103, %107 : vector<8x32xf32>
    %109 = vector.broadcast %88 : vector<1x32xf32> to vector<8x32xf32>
    %110 = arith.mulf %108, %109 : vector<8x32xf32>
    %111 = vector.broadcast %90 : vector<1x32xf32> to vector<8x32xf32>
    %112 = arith.addf %110, %111 : vector<8x32xf32>
    %c0_50 = arith.constant 0 : index
    %c0_51 = arith.constant 0 : index
    %c0_52 = arith.constant 0 : index
    %113 = vector.load %arg11[%c0_50, %c0_51, %c0_52] : memref<2x32x64xf32, #tpu.memory_space<vmem>>, vector<1x32x64xf32>
    %114 = vector.shape_cast %113 : vector<1x32x64xf32> to vector<32x64xf32>
    %cst_53 = arith.constant dense<0.000000e+00> : vector<8x64xf32>
    %115 = tpu.matmul %112, %114, %cst_53 {dimension_numbers = #tpu.dot_dimension_numbers<[1], [0], [0], [1], [0, 0, 1, 1], [], []>} : vector<8x32xf32>, vector<32x64xf32>, vector<8x64xf32> -> vector<8x64xf32>
    %c0_54 = arith.constant 0 : index
    %c0_55 = arith.constant 0 : index
    %c0_56 = arith.constant 0 : index
    %116 = vector.load %arg12[%c0_54, %c0_55, %c0_56] : memref<2x1x64xf32, #tpu.memory_space<vmem>>, vector<1x1x64xf32>
    %117 = vector.shape_cast %116 : vector<1x1x64xf32> to vector<1x64xf32>
    %118 = vector.broadcast %117 : vector<1x64xf32> to vector<8x64xf32>
    %119 = arith.addf %115, %118 : vector<8x64xf32>
    %120 = arith.mulf %119, %119 : vector<8x64xf32>
    %121 = arith.mulf %119, %120 : vector<8x64xf32>
    %cst_57 = arith.constant 4.471500e-02 : f32
    %122 = vector.broadcast %cst_57 : f32 to vector<8x64xf32>
    %123 = arith.mulf %122, %121 : vector<8x64xf32>
    %124 = arith.addf %119, %123 : vector<8x64xf32>
    %cst_58 = arith.constant 0.797884583 : f32
    %125 = vector.broadcast %cst_58 : f32 to vector<8x64xf32>
    %126 = arith.mulf %125, %124 : vector<8x64xf32>
    %127 = math.tanh %126 : vector<8x64xf32>
    %cst_59 = arith.constant 1.000000e+00 : f32
    %128 = vector.broadcast %cst_59 : f32 to vector<8x64xf32>
    %129 = arith.addf %128, %127 : vector<8x64xf32>
    %cst_60 = arith.constant 5.000000e-01 : f32
    %130 = vector.broadcast %cst_60 : f32 to vector<8x64xf32>
    %131 = arith.mulf %130, %129 : vector<8x64xf32>
    %132 = arith.mulf %119, %131 : vector<8x64xf32>
    %c0_61 = arith.constant 0 : index
    %c0_62 = arith.constant 0 : index
    %c0_63 = arith.constant 0 : index
    %133 = vector.load %arg13[%c0_61, %c0_62, %c0_63] : memref<2x64x32xf32, #tpu.memory_space<vmem>>, vector<1x64x32xf32>
    %134 = vector.shape_cast %133 : vector<1x64x32xf32> to vector<64x32xf32>
    %cst_64 = arith.constant dense<0.000000e+00> : vector<8x32xf32>
    %135 = tpu.matmul %132, %134, %cst_64 {dimension_numbers = #tpu.dot_dimension_numbers<[1], [0], [0], [1], [0, 0, 1, 1], [], []>} : vector<8x64xf32>, vector<64x32xf32>, vector<8x32xf32> -> vector<8x32xf32>
    %c0_65 = arith.constant 0 : index
    %c0_66 = arith.constant 0 : index
    %c0_67 = arith.constant 0 : index
    %136 = vector.load %arg14[%c0_65, %c0_66, %c0_67] : memref<2x1x32xf32, #tpu.memory_space<vmem>>, vector<1x1x32xf32>
    %137 = vector.shape_cast %136 : vector<1x1x32xf32> to vector<1x32xf32>
    %138 = vector.broadcast %137 : vector<1x32xf32> to vector<8x32xf32>
    %139 = arith.addf %135, %138 : vector<8x32xf32>
    %140 = arith.addf %112, %139 : vector<8x32xf32>
    %c0_68 = arith.constant 0 : index
    %c0_69 = arith.constant 0 : index
    %c0_70 = arith.constant 0 : index
    %141 = vector.load %arg15[%c0_68, %c0_69, %c0_70] : memref<2x1x32xf32, #tpu.memory_space<vmem>>, vector<1x1x32xf32>
    %142 = vector.shape_cast %141 : vector<1x1x32xf32> to vector<1x32xf32>
    %c0_71 = arith.constant 0 : index
    %c0_72 = arith.constant 0 : index
    %c0_73 = arith.constant 0 : index
    %143 = vector.load %arg16[%c0_71, %c0_72, %c0_73] : memref<2x1x32xf32, #tpu.memory_space<vmem>>, vector<1x1x32xf32>
    %144 = vector.shape_cast %143 : vector<1x1x32xf32> to vector<1x32xf32>
    %cst_74 = arith.constant dense<0.000000e+00> : vector<8xf32>
    %145 = vector.multi_reduction <add>, %140, %cst_74 [1] : vector<8x32xf32> to vector<8xf32>
    %146 = vector.shape_cast %145 : vector<8xf32> to vector<8x1xf32>
    %cst_75 = arith.constant 3.200000e+01 : f32
    %147 = vector.broadcast %cst_75 : f32 to vector<8x1xf32>
    %148 = arith.divf %146, %147 : vector<8x1xf32>
    %149 = vector.broadcast %148 : vector<8x1xf32> to vector<8x32xf32>
    %150 = arith.subf %140, %149 : vector<8x32xf32>
    %151 = arith.mulf %150, %150 : vector<8x32xf32>
    %cst_76 = arith.constant dense<0.000000e+00> : vector<8xf32>
    %152 = vector.multi_reduction <add>, %151, %cst_76 [1] : vector<8x32xf32> to vector<8xf32>
    %153 = vector.shape_cast %152 : vector<8xf32> to vector<8x1xf32>
    %cst_77 = arith.constant 3.200000e+01 : f32
    %154 = vector.broadcast %cst_77 : f32 to vector<8x1xf32>
    %155 = arith.divf %153, %154 : vector<8x1xf32>
    %156 = vector.broadcast %148 : vector<8x1xf32> to vector<8x32xf32>
    %157 = arith.subf %140, %156 : vector<8x32xf32>
    %cst_78 = arith.constant 9.99999974E-6 : f32
    %158 = vector.broadcast %cst_78 : f32 to vector<8x1xf32>
    %159 = arith.addf %155, %158 : vector<8x1xf32>
    %160 = math.rsqrt %159 : vector<8x1xf32>
    %161 = vector.broadcast %160 : vector<8x1xf32> to vector<8x32xf32>
    %162 = arith.mulf %157, %161 : vector<8x32xf32>
    %163 = vector.broadcast %142 : vector<1x32xf32> to vector<8x32xf32>
    %164 = arith.mulf %162, %163 : vector<8x32xf32>
    %165 = vector.broadcast %144 : vector<1x32xf32> to vector<8x32xf32>
    %166 = arith.addf %164, %165 : vector<8x32xf32>
    %c1 = arith.constant 1 : index
    %c0_79 = arith.constant 0 : index
    %c0_80 = arith.constant 0 : index
    %167 = vector.load %arg5[%c1, %c0_79, %c0_80] : memref<2x32x96xf32, #tpu.memory_space<vmem>>, vector<1x32x96xf32>
    %168 = vector.shape_cast %167 : vector<1x32x96xf32> to vector<32x96xf32>
    %c1_81 = arith.constant 1 : index
    %c0_82 = arith.constant 0 : index
    %c0_83 = arith.constant 0 : index
    %169 = vector.load %arg6[%c1_81, %c0_82, %c0_83] : memref<2x1x96xf32, #tpu.memory_space<vmem>>, vector<1x1x96xf32>
    %170 = vector.shape_cast %169 : vector<1x1x96xf32> to vector<1x96xf32>
    %c1_84 = arith.constant 1 : index
    %c0_85 = arith.constant 0 : index
    %c0_86 = arith.constant 0 : index
    %171 = vector.load %arg7[%c1_84, %c0_85, %c0_86] : memref<2x32x32xf32, #tpu.memory_space<vmem>>, vector<1x32x32xf32>
    %172 = vector.shape_cast %171 : vector<1x32x32xf32> to vector<32x32xf32>
    %c1_87 = arith.constant 1 : index
    %c0_88 = arith.constant 0 : index
    %c0_89 = arith.constant 0 : index
    %173 = vector.load %arg8[%c1_87, %c0_88, %c0_89] : memref<2x1x32xf32, #tpu.memory_space<vmem>>, vector<1x1x32xf32>
    %174 = vector.shape_cast %173 : vector<1x1x32xf32> to vector<1x32xf32>
    %cst_90 = arith.constant dense<0.000000e+00> : vector<8x96xf32>
    %175 = tpu.matmul %166, %168, %cst_90 {dimension_numbers = #tpu.dot_dimension_numbers<[1], [0], [0], [1], [0, 0, 1, 1], [], []>} : vector<8x32xf32>, vector<32x96xf32>, vector<8x96xf32> -> vector<8x96xf32>
    %176 = vector.broadcast %170 : vector<1x96xf32> to vector<8x96xf32>
    %177 = arith.addf %175, %176 : vector<8x96xf32>
    %cst_91 = arith.constant 0.000000e+00 : f32
    %178 = vector.broadcast %cst_91 : f32 to vector<8x32xf32>
    %179 = vector.extract_strided_slice %177 {offsets = [0, 0], sizes = [8, 16], strides = [1, 1]} : vector<8x96xf32> to vector<8x16xf32>
    %180 = vector.extract_strided_slice %177 {offsets = [0, 32], sizes = [8, 16], strides = [1, 1]} : vector<8x96xf32> to vector<8x16xf32>
    %181 = vector.extract_strided_slice %177 {offsets = [0, 64], sizes = [8, 16], strides = [1, 1]} : vector<8x96xf32> to vector<8x16xf32>
    %cst_92 = arith.constant dense<0.000000e+00> : vector<8x8xf32>
    %182 = tpu.matmul %179, %180, %cst_92 {dimension_numbers = #tpu.dot_dimension_numbers<[1], [1], [0], [0], [0, 0, 1, 0], [], []>} : vector<8x16xf32>, vector<8x16xf32>, vector<8x8xf32> -> vector<8x8xf32>
    %cst_93 = arith.constant 2.500000e-01 : f32
    %183 = vector.broadcast %cst_93 : f32 to vector<8x8xf32>
    %184 = arith.mulf %182, %183 : vector<8x8xf32>
    %185 = vector.broadcast %27 : vector<1x8xf32> to vector<8x8xf32>
    %186 = arith.addf %184, %185 : vector<8x8xf32>
    %cst_94 = arith.constant dense<0xFF800000> : vector<8xf32>
    %187 = vector.multi_reduction <maximumf>, %186, %cst_94 [1] : vector<8x8xf32> to vector<8xf32>
    %188 = vector.shape_cast %187 : vector<8xf32> to vector<8x1xf32>
    %189 = vector.broadcast %188 : vector<8x1xf32> to vector<8x8xf32>
    %190 = arith.subf %186, %189 : vector<8x8xf32>
    %191 = math.exp %190 : vector<8x8xf32>
    %cst_95 = arith.constant dense<0.000000e+00> : vector<8xf32>
    %192 = vector.multi_reduction <add>, %191, %cst_95 [1] : vector<8x8xf32> to vector<8xf32>
    %193 = vector.shape_cast %192 : vector<8xf32> to vector<8x1xf32>
    %194 = tpu.reciprocal %193 {approx = true} : vector<8x1xf32> -> vector<8x1xf32>
    %195 = vector.broadcast %194 : vector<8x1xf32> to vector<8x8xf32>
    %196 = arith.mulf %191, %195 : vector<8x8xf32>
    %cst_96 = arith.constant dense<0.000000e+00> : vector<8x16xf32>
    %197 = tpu.matmul %196, %181, %cst_96 {dimension_numbers = #tpu.dot_dimension_numbers<[1], [0], [0], [1], [0, 0, 1, 1], [], []>} : vector<8x8xf32>, vector<8x16xf32>, vector<8x16xf32> -> vector<8x16xf32>
    %198 = vector.extract_strided_slice %172 {offsets = [0, 0], sizes = [16, 32], strides = [1, 1]} : vector<32x32xf32> to vector<16x32xf32>
    %cst_97 = arith.constant dense<0.000000e+00> : vector<8x32xf32>
    %199 = tpu.matmul %197, %198, %cst_97 {dimension_numbers = #tpu.dot_dimension_numbers<[1], [0], [0], [1], [0, 0, 1, 1], [], []>} : vector<8x16xf32>, vector<16x32xf32>, vector<8x32xf32> -> vector<8x32xf32>
    %200 = arith.addf %178, %199 : vector<8x32xf32>
    %201 = vector.extract_strided_slice %177 {offsets = [0, 16], sizes = [8, 16], strides = [1, 1]} : vector<8x96xf32> to vector<8x16xf32>
    %202 = vector.extract_strided_slice %177 {offsets = [0, 48], sizes = [8, 16], strides = [1, 1]} : vector<8x96xf32> to vector<8x16xf32>
    %203 = vector.extract_strided_slice %177 {offsets = [0, 80], sizes = [8, 16], strides = [1, 1]} : vector<8x96xf32> to vector<8x16xf32>
    %cst_98 = arith.constant dense<0.000000e+00> : vector<8x8xf32>
    %204 = tpu.matmul %201, %202, %cst_98 {dimension_numbers = #tpu.dot_dimension_numbers<[1], [1], [0], [0], [0, 0, 1, 0], [], []>} : vector<8x16xf32>, vector<8x16xf32>, vector<8x8xf32> -> vector<8x8xf32>
    %cst_99 = arith.constant 2.500000e-01 : f32
    %205 = vector.broadcast %cst_99 : f32 to vector<8x8xf32>
    %206 = arith.mulf %204, %205 : vector<8x8xf32>
    %207 = vector.broadcast %27 : vector<1x8xf32> to vector<8x8xf32>
    %208 = arith.addf %206, %207 : vector<8x8xf32>
    %cst_100 = arith.constant dense<0xFF800000> : vector<8xf32>
    %209 = vector.multi_reduction <maximumf>, %208, %cst_100 [1] : vector<8x8xf32> to vector<8xf32>
    %210 = vector.shape_cast %209 : vector<8xf32> to vector<8x1xf32>
    %211 = vector.broadcast %210 : vector<8x1xf32> to vector<8x8xf32>
    %212 = arith.subf %208, %211 : vector<8x8xf32>
    %213 = math.exp %212 : vector<8x8xf32>
    %cst_101 = arith.constant dense<0.000000e+00> : vector<8xf32>
    %214 = vector.multi_reduction <add>, %213, %cst_101 [1] : vector<8x8xf32> to vector<8xf32>
    %215 = vector.shape_cast %214 : vector<8xf32> to vector<8x1xf32>
    %216 = tpu.reciprocal %215 {approx = true} : vector<8x1xf32> -> vector<8x1xf32>
    %217 = vector.broadcast %216 : vector<8x1xf32> to vector<8x8xf32>
    %218 = arith.mulf %213, %217 : vector<8x8xf32>
    %cst_102 = arith.constant dense<0.000000e+00> : vector<8x16xf32>
    %219 = tpu.matmul %218, %203, %cst_102 {dimension_numbers = #tpu.dot_dimension_numbers<[1], [0], [0], [1], [0, 0, 1, 1], [], []>} : vector<8x8xf32>, vector<8x16xf32>, vector<8x16xf32> -> vector<8x16xf32>
    %220 = vector.extract_strided_slice %172 {offsets = [16, 0], sizes = [16, 32], strides = [1, 1]} : vector<32x32xf32> to vector<16x32xf32>
    %cst_103 = arith.constant dense<0.000000e+00> : vector<8x32xf32>
    %221 = tpu.matmul %219, %220, %cst_103 {dimension_numbers = #tpu.dot_dimension_numbers<[1], [0], [0], [1], [0, 0, 1, 1], [], []>} : vector<8x16xf32>, vector<16x32xf32>, vector<8x32xf32> -> vector<8x32xf32>
    %222 = arith.addf %200, %221 : vector<8x32xf32>
    %223 = arith.addf %166, %222 : vector<8x32xf32>
    %224 = vector.broadcast %174 : vector<1x32xf32> to vector<8x32xf32>
    %225 = arith.addf %223, %224 : vector<8x32xf32>
    %c1_104 = arith.constant 1 : index
    %c0_105 = arith.constant 0 : index
    %c0_106 = arith.constant 0 : index
    %226 = vector.load %arg9[%c1_104, %c0_105, %c0_106] : memref<2x1x32xf32, #tpu.memory_space<vmem>>, vector<1x1x32xf32>
    %227 = vector.shape_cast %226 : vector<1x1x32xf32> to vector<1x32xf32>
    %c1_107 = arith.constant 1 : index
    %c0_108 = arith.constant 0 : index
    %c0_109 = arith.constant 0 : index
    %228 = vector.load %arg10[%c1_107, %c0_108, %c0_109] : memref<2x1x32xf32, #tpu.memory_space<vmem>>, vector<1x1x32xf32>
    %229 = vector.shape_cast %228 : vector<1x1x32xf32> to vector<1x32xf32>
    %cst_110 = arith.constant dense<0.000000e+00> : vector<8xf32>
    %230 = vector.multi_reduction <add>, %225, %cst_110 [1] : vector<8x32xf32> to vector<8xf32>
    %231 = vector.shape_cast %230 : vector<8xf32> to vector<8x1xf32>
    %cst_111 = arith.constant 3.200000e+01 : f32
    %232 = vector.broadcast %cst_111 : f32 to vector<8x1xf32>
    %233 = arith.divf %231, %232 : vector<8x1xf32>
    %234 = vector.broadcast %233 : vector<8x1xf32> to vector<8x32xf32>
    %235 = arith.subf %225, %234 : vector<8x32xf32>
    %236 = arith.mulf %235, %235 : vector<8x32xf32>
    %cst_112 = arith.constant dense<0.000000e+00> : vector<8xf32>
    %237 = vector.multi_reduction <add>, %236, %cst_112 [1] : vector<8x32xf32> to vector<8xf32>
    %238 = vector.shape_cast %237 : vector<8xf32> to vector<8x1xf32>
    %cst_113 = arith.constant 3.200000e+01 : f32
    %239 = vector.broadcast %cst_113 : f32 to vector<8x1xf32>
    %240 = arith.divf %238, %239 : vector<8x1xf32>
    %241 = vector.broadcast %233 : vector<8x1xf32> to vector<8x32xf32>
    %242 = arith.subf %225, %241 : vector<8x32xf32>
    %cst_114 = arith.constant 9.99999974E-6 : f32
    %243 = vector.broadcast %cst_114 : f32 to vector<8x1xf32>
    %244 = arith.addf %240, %243 : vector<8x1xf32>
    %245 = math.rsqrt %244 : vector<8x1xf32>
    %246 = vector.broadcast %245 : vector<8x1xf32> to vector<8x32xf32>
    %247 = arith.mulf %242, %246 : vector<8x32xf32>
    %248 = vector.broadcast %227 : vector<1x32xf32> to vector<8x32xf32>
    %249 = arith.mulf %247, %248 : vector<8x32xf32>
    %250 = vector.broadcast %229 : vector<1x32xf32> to vector<8x32xf32>
    %251 = arith.addf %249, %250 : vector<8x32xf32>
    %c1_115 = arith.constant 1 : index
    %c0_116 = arith.constant 0 : index
    %c0_117 = arith.constant 0 : index
    %252 = vector.load %arg11[%c1_115, %c0_116, %c0_117] : memref<2x32x64xf32, #tpu.memory_space<vmem>>, vector<1x32x64xf32>
    %253 = vector.shape_cast %252 : vector<1x32x64xf32> to vector<32x64xf32>
    %cst_118 = arith.constant dense<0.000000e+00> : vector<8x64xf32>
    %254 = tpu.matmul %251, %253, %cst_118 {dimension_numbers = #tpu.dot_dimension_numbers<[1], [0], [0], [1], [0, 0, 1, 1], [], []>} : vector<8x32xf32>, vector<32x64xf32>, vector<8x64xf32> -> vector<8x64xf32>
    %c1_119 = arith.constant 1 : index
    %c0_120 = arith.constant 0 : index
    %c0_121 = arith.constant 0 : index
    %255 = vector.load %arg12[%c1_119, %c0_120, %c0_121] : memref<2x1x64xf32, #tpu.memory_space<vmem>>, vector<1x1x64xf32>
    %256 = vector.shape_cast %255 : vector<1x1x64xf32> to vector<1x64xf32>
    %257 = vector.broadcast %256 : vector<1x64xf32> to vector<8x64xf32>
    %258 = arith.addf %254, %257 : vector<8x64xf32>
    %259 = arith.mulf %258, %258 : vector<8x64xf32>
    %260 = arith.mulf %258, %259 : vector<8x64xf32>
    %cst_122 = arith.constant 4.471500e-02 : f32
    %261 = vector.broadcast %cst_122 : f32 to vector<8x64xf32>
    %262 = arith.mulf %261, %260 : vector<8x64xf32>
    %263 = arith.addf %258, %262 : vector<8x64xf32>
    %cst_123 = arith.constant 0.797884583 : f32
    %264 = vector.broadcast %cst_123 : f32 to vector<8x64xf32>
    %265 = arith.mulf %264, %263 : vector<8x64xf32>
    %266 = math.tanh %265 : vector<8x64xf32>
    %cst_124 = arith.constant 1.000000e+00 : f32
    %267 = vector.broadcast %cst_124 : f32 to vector<8x64xf32>
    %268 = arith.addf %267, %266 : vector<8x64xf32>
    %cst_125 = arith.constant 5.000000e-01 : f32
    %269 = vector.broadcast %cst_125 : f32 to vector<8x64xf32>
    %270 = arith.mulf %269, %268 : vector<8x64xf32>
    %271 = arith.mulf %258, %270 : vector<8x64xf32>
    %c1_126 = arith.constant 1 : index
    %c0_127 = arith.constant 0 : index
    %c0_128 = arith.constant 0 : index
    %272 = vector.load %arg13[%c1_126, %c0_127, %c0_128] : memref<2x64x32xf32, #tpu.memory_space<vmem>>, vector<1x64x32xf32>
    %273 = vector.shape_cast %272 : vector<1x64x32xf32> to vector<64x32xf32>
    %cst_129 = arith.constant dense<0.000000e+00> : vector<8x32xf32>
    %274 = tpu.matmul %271, %273, %cst_129 {dimension_numbers = #tpu.dot_dimension_numbers<[1], [0], [0], [1], [0, 0, 1, 1], [], []>} : vector<8x64xf32>, vector<64x32xf32>, vector<8x32xf32> -> vector<8x32xf32>
    %c1_130 = arith.constant 1 : index
    %c0_131 = arith.constant 0 : index
    %c0_132 = arith.constant 0 : index
    %275 = vector.load %arg14[%c1_130, %c0_131, %c0_132] : memref<2x1x32xf32, #tpu.memory_space<vmem>>, vector<1x1x32xf32>
    %276 = vector.shape_cast %275 : vector<1x1x32xf32> to vector<1x32xf32>
    %277 = vector.broadcast %276 : vector<1x32xf32> to vector<8x32xf32>
    %278 = arith.addf %274, %277 : vector<8x32xf32>
    %279 = arith.addf %251, %278 : vector<8x32xf32>
    %c1_133 = arith.constant 1 : index
    %c0_134 = arith.constant 0 : index
    %c0_135 = arith.constant 0 : index
    %280 = vector.load %arg15[%c1_133, %c0_134, %c0_135] : memref<2x1x32xf32, #tpu.memory_space<vmem>>, vector<1x1x32xf32>
    %281 = vector.shape_cast %280 : vector<1x1x32xf32> to vector<1x32xf32>
    %c1_136 = arith.constant 1 : index
    %c0_137 = arith.constant 0 : index
    %c0_138 = arith.constant 0 : index
    %282 = vector.load %arg16[%c1_136, %c0_137, %c0_138] : memref<2x1x32xf32, #tpu.memory_space<vmem>>, vector<1x1x32xf32>
    %283 = vector.shape_cast %282 : vector<1x1x32xf32> to vector<1x32xf32>
    %cst_139 = arith.constant dense<0.000000e+00> : vector<8xf32>
    %284 = vector.multi_reduction <add>, %279, %cst_139 [1] : vector<8x32xf32> to vector<8xf32>
    %285 = vector.shape_cast %284 : vector<8xf32> to vector<8x1xf32>
    %cst_140 = arith.constant 3.200000e+01 : f32
    %286 = vector.broadcast %cst_140 : f32 to vector<8x1xf32>
    %287 = arith.divf %285, %286 : vector<8x1xf32>
    %288 = vector.broadcast %287 : vector<8x1xf32> to vector<8x32xf32>
    %289 = arith.subf %279, %288 : vector<8x32xf32>
    %290 = arith.mulf %289, %289 : vector<8x32xf32>
    %cst_141 = arith.constant dense<0.000000e+00> : vector<8xf32>
    %291 = vector.multi_reduction <add>, %290, %cst_141 [1] : vector<8x32xf32> to vector<8xf32>
    %292 = vector.shape_cast %291 : vector<8xf32> to vector<8x1xf32>
    %cst_142 = arith.constant 3.200000e+01 : f32
    %293 = vector.broadcast %cst_142 : f32 to vector<8x1xf32>
    %294 = arith.divf %292, %293 : vector<8x1xf32>
    %295 = vector.broadcast %287 : vector<8x1xf32> to vector<8x32xf32>
    %296 = arith.subf %279, %295 : vector<8x32xf32>
    %cst_143 = arith.constant 9.99999974E-6 : f32
    %297 = vector.broadcast %cst_143 : f32 to vector<8x1xf32>
    %298 = arith.addf %294, %297 : vector<8x1xf32>
    %299 = math.rsqrt %298 : vector<8x1xf32>
    %300 = vector.broadcast %299 : vector<8x1xf32> to vector<8x32xf32>
    %301 = arith.mulf %296, %300 : vector<8x32xf32>
    %302 = vector.broadcast %281 : vector<1x32xf32> to vector<8x32xf32>
    %303 = arith.mulf %301, %302 : vector<8x32xf32>
    %304 = vector.broadcast %283 : vector<1x32xf32> to vector<8x32xf32>
    %305 = arith.addf %303, %304 : vector<8x32xf32>
    %306 = vector.extract_strided_slice %305 {offsets = [0, 0], sizes = [1, 32], strides = [1, 1]} : vector<8x32xf32> to vector<1x32xf32>
    %c0_144 = arith.constant 0 : index
    %c0_145 = arith.constant 0 : index
    %307 = vector.load %arg17[%c0_144, %c0_145] : memref<32x128xf32, #tpu.memory_space<vmem>>, vector<32x128xf32>
    %cst_146 = arith.constant dense<0.000000e+00> : vector<1x128xf32>
    %308 = tpu.matmul %306, %307, %cst_146 {dimension_numbers = #tpu.dot_dimension_numbers<[1], [0], [0], [1], [0, 0, 1, 1], [], []>} : vector<1x32xf32>, vector<32x128xf32>, vector<1x128xf32> -> vector<1x128xf32>
    %c0_147 = arith.constant 0 : index
    %c0_148 = arith.constant 0 : index
    %309 = vector.load %arg18[%c0_147, %c0_148] : memref<1x128xf32, #tpu.memory_space<vmem>>, vector<1x128xf32>
    %310 = arith.addf %308, %309 : vector<1x128xf32>
    %311 = math.tanh %310 : vector<1x128xf32>
    %c0_149 = arith.constant 0 : index
    %c0_150 = arith.constant 0 : index
    %c0_151 = arith.constant 0 : index
    %312 = vector.load %arg19[%c0_149, %c0_150, %c0_151] : memref<1x1x128xf32, #tpu.memory_space<vmem>>, vector<1x1x128xf32>
    %313 = vector.shape_cast %312 : vector<1x1x128xf32> to vector<1x128xf32>
    %314 = vector.shape_cast %311 : vector<1x128xf32> to vector<1x1x128xf32>
    tpu.vector_store %arg19[%c0_149, %c0_150, %c0_151], %314 {strides = array<i32>} : memref<1x1x128xf32, #tpu.memory_space<vmem>>, vector<1x1x128xf32>,
    return
  }
  func.func @transform_0(%arg0: i32) -> (i32, i32, i32) {
    %c0_i32 = arith.constant 0 : i32
    %c0_i32_0 = arith.constant 0 : i32
    %c0_i32_1 = arith.constant 0 : i32
    return %arg0, %c0_i32, %c0_i32_0 : i32, i32, i32
  }
  func.func @transform_1(%arg0: i32) -> (i32, i32, i32) {
    %c0_i32 = arith.constant 0 : i32
    %c0_i32_0 = arith.constant 0 : i32
    %c0_i32_1 = arith.constant 0 : i32
    return %arg0, %c0_i32, %c0_i32_0 : i32, i32, i32
  }
  func.func @transform_2(%arg0: i32) -> (i32, i32) {
    %c0_i32 = arith.constant 0 : i32
    %c0_i32_0 = arith.constant 0 : i32
    %c0_i32_1 = arith.constant 0 : i32
    return %c0_i32, %c0_i32_0 : i32, i32
  }
  func.func @transform_3(%arg0: i32) -> (i32, i32) {
    %c0_i32 = arith.constant 0 : i32
    %c0_i32_0 = arith.constant 0 : i32
    %c0_i32_1 = arith.constant 0 : i32
    return %c0_i32, %c0_i32_0 : i32, i32
  }
  func.func @transform_4(%arg0: i32) -> (i32, i32, i32) {
    %c0_i32 = arith.constant 0 : i32
    %c0_i32_0 = arith.constant 0 : i32
    %c0_i32_1 = arith.constant 0 : i32
    %c0_i32_2 = arith.constant 0 : i32
    return %c0_i32, %c0_i32_0, %c0_i32_1 : i32, i32, i32
  }
  func.func @transform_5(%arg0: i32) -> (i32, i32, i32) {
    %c0_i32 = arith.constant 0 : i32
    %c0_i32_0 = arith.constant 0 : i32
    %c0_i32_1 = arith.constant 0 : i32
    %c0_i32_2 = arith.constant 0 : i32
    return %c0_i32, %c0_i32_0, %c0_i32_1 : i32, i32, i32
  }
  func.func @transform_6(%arg0: i32) -> (i32, i32, i32) {
    %c0_i32 = arith.constant 0 : i32
    %c0_i32_0 = arith.constant 0 : i32
    %c0_i32_1 = arith.constant 0 : i32
    %c0_i32_2 = arith.constant 0 : i32
    return %c0_i32, %c0_i32_0, %c0_i32_1 : i32, i32, i32
  }
  func.func @transform_7(%arg0: i32) -> (i32, i32, i32) {
    %c0_i32 = arith.constant 0 : i32
    %c0_i32_0 = arith.constant 0 : i32
    %c0_i32_1 = arith.constant 0 : i32
    %c0_i32_2 = arith.constant 0 : i32
    return %c0_i32, %c0_i32_0, %c0_i32_1 : i32, i32, i32
  }
  func.func @transform_8(%arg0: i32) -> (i32, i32, i32) {
    %c0_i32 = arith.constant 0 : i32
    %c0_i32_0 = arith.constant 0 : i32
    %c0_i32_1 = arith.constant 0 : i32
    %c0_i32_2 = arith.constant 0 : i32
    return %c0_i32, %c0_i32_0, %c0_i32_1 : i32, i32, i32
  }
  func.func @transform_9(%arg0: i32) -> (i32, i32, i32) {
    %c0_i32 = arith.constant 0 : i32
    %c0_i32_0 = arith.constant 0 : i32
    %c0_i32_1 = arith.constant 0 : i32
    %c0_i32_2 = arith.constant 0 : i32
    return %c0_i32, %c0_i32_0, %c0_i32_1 : i32, i32, i32
  }
  func.func @transform_10(%arg0: i32) -> (i32, i32, i32) {
    %c0_i32 = arith.constant 0 : i32
    %c0_i32_0 = arith.constant 0 : i32
    %c0_i32_1 = arith.constant 0 : i32
    %c0_i32_2 = arith.constant 0 : i32
    return %c0_i32, %c0_i32_0, %c0_i32_1 : i32, i32, i32
  }
  func.func @transform_11(%arg0: i32) -> (i32, i32, i32) {
    %c0_i32 = arith.constant 0 : i32
    %c0_i32_0 = arith.constant 0 : i32
    %c0_i32_1 = arith.constant 0 : i32
    %c0_i32_2 = arith.constant 0 : i32
    return %c0_i32, %c0_i32_0, %c0_i32_1 : i32, i32, i32
  }
  func.func @transform_12(%arg0: i32) -> (i32, i32, i32) {
    %c0_i32 = arith.constant 0 : i32
    %c0_i32_0 = arith.constant 0 : i32
    %c0_i32_1 = arith.constant 0 : i32
    %c0_i32_2 = arith.constant 0 : i32
    return %c0_i32, %c0_i32_0, %c0_i32_1 : i32, i32, i32
  }
  func.func @transform_13(%arg0: i32) -> (i32, i32, i32) {
    %c0_i32 = arith.constant 0 : i32
    %c0_i32_0 = arith.constant 0 : i32
    %c0_i32_1 = arith.constant 0 : i32
    %c0_i32_2 = arith.constant 0 : i32
    return %c0_i32, %c0_i32_0, %c0_i32_1 : i32, i32, i32
  }
  func.func @transform_14(%arg0: i32) -> (i32, i32, i32) {
    %c0_i32 = arith.constant 0 : i32
    %c0_i32_0 = arith.constant 0 : i32
    %c0_i32_1 = arith.constant 0 : i32
    %c0_i32_2 = arith.constant 0 : i32
    return %c0_i32, %c0_i32_0, %c0_i32_1 : i32, i32, i32
  }
  func.func @transform_15(%arg0: i32) -> (i32, i32, i32) {
    %c0_i32 = arith.constant 0 : i32
    %c0_i32_0 = arith.constant 0 : i32
    %c0_i32_1 = arith.constant 0 : i32
    %c0_i32_2 = arith.constant 0 : i32
    return %c0_i32, %c0_i32_0, %c0_i32_1 : i32, i32, i32
  }
  func.func @transform_16(%arg0: i32) -> (i32, i32) {
    %c0_i32 = arith.constant 0 : i32
    %c0_i32_0 = arith.constant 0 : i32
    %c0_i32_1 = arith.constant 0 : i32
    return %c0_i32, %c0_i32_0 : i32, i32
  }
  func.func @transform_17(%arg0: i32) -> (i32, i32) {
    %c0_i32 = arith.constant 0 : i32
    %c0_i32_0 = arith.constant 0 : i32
    %c0_i32_1 = arith.constant 0 : i32
    return %c0_i32, %c0_i32_0 : i32, i32
  }
  func.func @transform_18(%arg0: i32) -> (i32, i32, i32) {
    %c0_i32 = arith.constant 0 : i32
    %c0_i32_0 = arith.constant 0 : i32
    %c0_i32_1 = arith.constant 0 : i32
    return %arg0, %c0_i32, %c0_i32_0 : i32, i32, i32
  }
}

</mosaic_0001>

<llo_original>
// kernel: _encode_impl.1
$region0: #{_encode_impl.1}
  #allocation0 [shape = 'u32[]', space=smem, size = 0x4, offset = 0x4, fixed_abs, tag = 'smem constant byte address 0x4 - core index']
  #allocation1 [shape = 'u32[72,128]{1,0:T(1,128)}', space=vmem, size = 0x9000, scoped, tag = 'internal scratch']
  %s0 = inlined_call_operand.vmem [shape: f32[2,8,32], index: 0, kind: input, shape index: {}]
  %s1 = inlined_call_operand.vmem [shape: f32[2,1,8], index: 1, kind: input, shape index: {}]
  %s2 = inlined_call_operand.vmem [shape: f32[1,32], index: 2, kind: input, shape index: {}]
  %s3 = inlined_call_operand.vmem [shape: f32[1,32], index: 3, kind: input, shape index: {}]
  %s4 = inlined_call_operand.vmem [shape: f32[2,32,96], index: 4, kind: input, shape index: {}]
  %s5 = inlined_call_operand.vmem [shape: f32[2,1,96], index: 5, kind: input, shape index: {}]
  %s6 = inlined_call_operand.vmem [shape: f32[2,32,32], index: 6, kind: input, shape index: {}]
  %s7 = inlined_call_operand.vmem [shape: f32[2,1,32], index: 7, kind: input, shape index: {}]
  %s8 = inlined_call_operand.vmem [shape: f32[2,1,32], index: 8, kind: input, shape index: {}]
  %s9 = inlined_call_operand.vmem [shape: f32[2,1,32], index: 9, kind: input, shape index: {}]
  %s10 = inlined_call_operand.vmem [shape: f32[2,32,64], index: 10, kind: input, shape index: {}]
  %s11 = inlined_call_operand.vmem [shape: f32[2,1,64], index: 11, kind: input, shape index: {}]
  %s12 = inlined_call_operand.vmem [shape: f32[2,64,32], index: 12, kind: input, shape index: {}]
  %s13 = inlined_call_operand.vmem [shape: f32[2,1,32], index: 13, kind: input, shape index: {}]
  %s14 = inlined_call_operand.vmem [shape: f32[2,1,32], index: 14, kind: input, shape index: {}]
  %s15 = inlined_call_operand.vmem [shape: f32[2,1,32], index: 15, kind: input, shape index: {}]
  %s16 = inlined_call_operand.vmem [shape: f32[32,128], index: 16, kind: input, shape index: {}]
  %s17 = inlined_call_operand.vmem [shape: f32[1,128], index: 17, kind: input, shape index: {}]
  %s18 = inlined_call_operand.hbm [shape: f32[2,1,128], index: 18, kind: output, shape index: {}]
  %s19 = sld [smem:[#allocation0]]
  $region105: #{_encode_impl.1} parent=0
    _
  %s21 = ssub.s32 1, %s19
  %s22 = scalar_select 0, %s21, %s19
  $region1: #{_encode_impl.1} parent=0
    #allocation2 [shape = 'u8[1024]{0}', space=vmem, size = 0x400, scoped, tag = 'output window, operand 0']
    #allocation3 [shape = 's32[2]{0}', space=sflag, size = 0x8, scoped, tag = 'scoped memory for _encode_impl.1']
    %23 = vsyncpa [#allocation3], 0
    %s24 = scalar_lea.sflag [#allocation3], 1
    %25 = vsyncpa %s24, 0
    loop: start=0, step=1, limit=4
    $region2: #{_encode_impl.1} parent=1 // loop_pre_header
      _
    $region3: #{_encode_impl.1} parent=1 // loop_header
      %s27 = sphi 0, %s31
      %p28 = scmp.ge.s32.totalorder %s27, 4
      %s37 = sphi 0, %s39
      %s40 = sphi 0, %s37
      %s41 = sphi 0, %s40
      %s57 = sphi 0, %s41
      %s63 = sphi 0, %s65
      %s66 = sphi 0, %s63
      %s67 = sphi 0, %s66
      %s83 = sphi 0, %s67
      %s87 = sphi 0, %s87
      %s89 = sphi 0, %s87
      %s90 = sphi 0, %s89
      %s104 = sphi 0, %s90
      %s108 = sphi 0, %s108
      %s110 = sphi 0, %s108
      %s111 = sphi 0, %s110
      %s125 = sphi 0, %s111
      %s129 = sphi 0, %s129
      %s131 = sphi 0, %s129
      %s132 = sphi 0, %s131
      %s146 = sphi 0, %s132
      %s150 = sphi 0, %s150
      %s152 = sphi 0, %s150
      %s153 = sphi 0, %s152
      %s167 = sphi 0, %s153
      %s171 = sphi 0, %s171
      %s173 = sphi 0, %s171
      %s174 = sphi 0, %s173
      %s188 = sphi 0, %s174
      %s192 = sphi 0, %s192
      %s194 = sphi 0, %s192
      %s195 = sphi 0, %s194
      %s209 = sphi 0, %s195
      %s213 = sphi 0, %s213
      %s215 = sphi 0, %s213
      %s216 = sphi 0, %s215
      %s230 = sphi 0, %s216
      %s234 = sphi 0, %s234
      %s236 = sphi 0, %s234
      %s237 = sphi 0, %s236
      %s251 = sphi 0, %s237
      %s255 = sphi 0, %s255
      %s257 = sphi 0, %s255
      %s258 = sphi 0, %s257
      %s272 = sphi 0, %s258
      %s276 = sphi 0, %s276
      %s278 = sphi 0, %s276
      %s279 = sphi 0, %s278
      %s293 = sphi 0, %s279
      %s297 = sphi 0, %s297
      %s299 = sphi 0, %s297
      %s300 = sphi 0, %s299
      %s314 = sphi 0, %s300
      %s318 = sphi 0, %s318
      %s320 = sphi 0, %s318
      %s321 = sphi 0, %s320
      %s335 = sphi 0, %s321
      %s339 = sphi 0, %s339
      %s341 = sphi 0, %s339
      %s342 = sphi 0, %s341
      %s356 = sphi 0, %s342
      %s360 = sphi 0, %s360
      %s362 = sphi 0, %s360
      %s363 = sphi 0, %s362
      %s377 = sphi 0, %s363
      %s381 = sphi 0, %s381
      %s383 = sphi 0, %s381
      %s384 = sphi 0, %s383
      %s398 = sphi 0, %s384
      %s402 = sphi 0, %s402
      %s404 = sphi 0, %s402
      %s405 = sphi 0, %s404
      %s419 = sphi 0, %s405
      %s425 = sphi 0, %s427
      %s428 = sphi 0, %s425
      %s429 = sphi 0, %s428
      %s445 = sphi 0, %s429
    $region4: #{_encode_impl.1} parent=1 // loop_header_branch
      %30 = sbr.rel (%p28) target = $region8
    $region5: #{_encode_impl.1} parent=1 // loop_body
      %s32 = ssub.s32 %s27, 1
      %s33 = ssub.s32 %s27, 2
      %s34 = sadd.s32 %s27, 1
      %s35 = ssub.s32 %s27, %s34
      %p36 = scmp.eq.s32.totalorder %s35, 0
      %s38 = sadd.s32 %s37, 1
      %s39 = scalar_select %p36, %s37, %s38
      %p42 = pneg %p36
      %p43 = scmp.eq.s32.totalorder %s27, 1
      %p44 = por %p42, %p43
      %p45 = scmp.ne.s32.totalorder %s37, %s40
      %p46 = scmp.eq.s32.totalorder %s27, 0
      %p47 = por %p45, %p46
      %p48 = scmp.ne.s32.totalorder %s37, %s40
      %p49 = scmp.eq.s32.totalorder %s32, 1
      %p50 = por %p48, %p49
      %p51 = scmp.ne.s32.totalorder %s40, %s41
      %p52 = scmp.eq.s32.totalorder %s32, 0
      %p53 = por %p51, %p52
      %p54 = scmp.ne.s32.totalorder %s40, %s41
      %p55 = scmp.eq.s32.totalorder %s33, 1
      %p56 = por %p54, %p55
      %p58 = scmp.ne.s32.totalorder %s41, %s57
      %p59 = scmp.eq.s32.totalorder %s33, 0
      %p60 = por %p58, %p59
      %s61 = ssub.s32 %s27, %s34
      %p62 = scmp.eq.s32.totalorder %s61, 0
      %s64 = sadd.s32 %s63, 1
      %s65 = scalar_select %p62, %s63, %s64
      %p68 = pneg %p62
      %p69 = scmp.eq.s32.totalorder %s27, 1
      %p70 = por %p68, %p69
      %p71 = scmp.ne.s32.totalorder %s63, %s66
      %p72 = scmp.eq.s32.totalorder %s27, 0
      %p73 = por %p71, %p72
      %p74 = scmp.ne.s32.totalorder %s63, %s66
      %p75 = scmp.eq.s32.totalorder %s32, 1
      %p76 = por %p74, %p75
      %p77 = scmp.ne.s32.totalorder %s66, %s67
      %p78 = scmp.eq.s32.totalorder %s32, 0
      %p79 = por %p77, %p78
      %p80 = scmp.ne.s32.totalorder %s66, %s67
      %p81 = scmp.eq.s32.totalorder %s33, 1
      %p82 = por %p80, %p81
      %p84 = scmp.ne.s32.totalorder %s67, %s83
      %p85 = scmp.eq.s32.totalorder %s33, 0
      %p86 = por %p84, %p85
      %s88 = sadd.s32 %s87, 1
      %p91 = scmp.eq.s32.totalorder %s27, 1
      %p92 = scmp.ne.s32.totalorder %s87, %s89
      %p93 = scmp.eq.s32.totalorder %s27, 0
      %p94 = por %p92, %p93
      %p95 = scmp.ne.s32.totalorder %s87, %s89
      %p96 = scmp.eq.s32.totalorder %s32, 1
      %p97 = por %p95, %p96
      %p98 = scmp.ne.s32.totalorder %s89, %s90
      %p99 = scmp.eq.s32.totalorder %s32, 0
      %p100 = por %p98, %p99
      %p101 = scmp.ne.s32.totalorder %s89, %s90
      %p102 = scmp.eq.s32.totalorder %s33, 1
      %p103 = por %p101, %p102
      %p105 = scmp.ne.s32.totalorder %s90, %s104
      %p106 = scmp.eq.s32.totalorder %s33, 0
      %p107 = por %p105, %p106
      %s109 = sadd.s32 %s108, 1
      %p112 = scmp.eq.s32.totalorder %s27, 1
      %p113 = scmp.ne.s32.totalorder %s108, %s110
      %p114 = scmp.eq.s32.totalorder %s27, 0
      %p115 = por %p113, %p114
      %p116 = scmp.ne.s32.totalorder %s108, %s110
      %p117 = scmp.eq.s32.totalorder %s32, 1
      %p118 = por %p116, %p117
      %p119 = scmp.ne.s32.totalorder %s110, %s111
      %p120 = scmp.eq.s32.totalorder %s32, 0
      %p121 = por %p119, %p120
      %p122 = scmp.ne.s32.totalorder %s110, %s111
      %p123 = scmp.eq.s32.totalorder %s33, 1
      %p124 = por %p122, %p123
      %p126 = scmp.ne.s32.totalorder %s111, %s125
      %p127 = scmp.eq.s32.totalorder %s33, 0
      %p128 = por %p126, %p127
      %s130 = sadd.s32 %s129, 1
      %p133 = scmp.eq.s32.totalorder %s27, 1
      %p134 = scmp.ne.s32.totalorder %s129, %s131
      %p135 = scmp.eq.s32.totalorder %s27, 0
      %p136 = por %p134, %p135
      %p137 = scmp.ne.s32.totalorder %s129, %s131
      %p138 = scmp.eq.s32.totalorder %s32, 1
      %p139 = por %p137, %p138
      %p140 = scmp.ne.s32.totalorder %s131, %s132
      %p141 = scmp.eq.s32.totalorder %s32, 0
      %p142 = por %p140, %p141
      %p143 = scmp.ne.s32.totalorder %s131, %s132
      %p144 = scmp.eq.s32.totalorder %s33, 1
      %p145 = por %p143, %p144
      %p147 = scmp.ne.s32.totalorder %s132, %s146
      %p148 = scmp.eq.s32.totalorder %s33, 0
      %p149 = por %p147, %p148
      %s151 = sadd.s32 %s150, 1
      %p154 = scmp.eq.s32.totalorder %s27, 1
      %p155 = scmp.ne.s32.totalorder %s150, %s152
      %p156 = scmp.eq.s32.totalorder %s27, 0
      %p157 = por %p155, %p156
      %p158 = scmp.ne.s32.totalorder %s150, %s152
      %p159 = scmp.eq.s32.totalorder %s32, 1
      %p160 = por %p158, %p159
      %p161 = scmp.ne.s32.totalorder %s152, %s153
      %p162 = scmp.eq.s32.totalorder %s32, 0
      %p163 = por %p161, %p162
      %p164 = scmp.ne.s32.totalorder %s152, %s153
      %p165 = scmp.eq.s32.totalorder %s33, 1
      %p166 = por %p164, %p165
      %p168 = scmp.ne.s32.totalorder %s153, %s167
      %p169 = scmp.eq.s32.totalorder %s33, 0
      %p170 = por %p168, %p169
      %s172 = sadd.s32 %s171, 1
      %p175 = scmp.eq.s32.totalorder %s27, 1
      %p176 = scmp.ne.s32.totalorder %s171, %s173
      %p177 = scmp.eq.s32.totalorder %s27, 0
      %p178 = por %p176, %p177
      %p179 = scmp.ne.s32.totalorder %s171, %s173
      %p180 = scmp.eq.s32.totalorder %s32, 1
      %p181 = por %p179, %p180
      %p182 = scmp.ne.s32.totalorder %s173, %s174
      %p183 = scmp.eq.s32.totalorder %s32, 0
      %p184 = por %p182, %p183
      %p185 = scmp.ne.s32.totalorder %s173, %s174
      %p186 = scmp.eq.s32.totalorder %s33, 1
      %p187 = por %p185, %p186
      %p189 = scmp.ne.s32.totalorder %s174, %s188
      %p190 = scmp.eq.s32.totalorder %s33, 0
      %p191 = por %p189, %p190
      %s193 = sadd.s32 %s192, 1
      %p196 = scmp.eq.s32.totalorder %s27, 1
      %p197 = scmp.ne.s32.totalorder %s192, %s194
      %p198 = scmp.eq.s32.totalorder %s27, 0
      %p199 = por %p197, %p198
      %p200 = scmp.ne.s32.totalorder %s192, %s194
      %p201 = scmp.eq.s32.totalorder %s32, 1
      %p202 = por %p200, %p201
      %p203 = scmp.ne.s32.totalorder %s194, %s195
      %p204 = scmp.eq.s32.totalorder %s32, 0
      %p205 = por %p203, %p204
      %p206 = scmp.ne.s32.totalorder %s194, %s195
      %p207 = scmp.eq.s32.totalorder %s33, 1
      %p208 = por %p206, %p207
      %p210 = scmp.ne.s32.totalorder %s195, %s209
      %p211 = scmp.eq.s32.totalorder %s33, 0
      %p212 = por %p210, %p211
      %s214 = sadd.s32 %s213, 1
      %p217 = scmp.eq.s32.totalorder %s27, 1
      %p218 = scmp.ne.s32.totalorder %s213, %s215
      %p219 = scmp.eq.s32.totalorder %s27, 0
      %p220 = por %p218, %p219
      %p221 = scmp.ne.s32.totalorder %s213, %s215
      %p222 = scmp.eq.s32.totalorder %s32, 1
      %p223 = por %p221, %p222
      %p224 = scmp.ne.s32.totalorder %s215, %s216
      %p225 = scmp.eq.s32.totalorder %s32, 0
      %p226 = por %p224, %p225
      %p227 = scmp.ne.s32.totalorder %s215, %s216
      %p228 = scmp.eq.s32.totalorder %s33, 1
      %p229 = por %p227, %p228
      %p231 = scmp.ne.s32.totalorder %s216, %s230
      %p232 = scmp.eq.s32.totalorder %s33, 0
      %p233 = por %p231, %p232
      %s235 = sadd.s32 %s234, 1
      %p238 = scmp.eq.s32.totalorder %s27, 1
      %p239 = scmp.ne.s32.totalorder %s234, %s236
      %p240 = scmp.eq.s32.totalorder %s27, 0
      %p241 = por %p239, %p240
      %p242 = scmp.ne.s32.totalorder %s234, %s236
      %p243 = scmp.eq.s32.totalorder %s32, 1
      %p244 = por %p242, %p243
      %p245 = scmp.ne.s32.totalorder %s236, %s237
      %p246 = scmp.eq.s32.totalorder %s32, 0
      %p247 = por %p245, %p246
      %p248 = scmp.ne.s32.totalorder %s236, %s237
      %p249 = scmp.eq.s32.totalorder %s33, 1
      %p250 = por %p248, %p249
      %p252 = scmp.ne.s32.totalorder %s237, %s251
      %p253 = scmp.eq.s32.totalorder %s33, 0
      %p254 = por %p252, %p253
      %s256 = sadd.s32 %s255, 1
      %p259 = scmp.eq.s32.totalorder %s27, 1
      %p260 = scmp.ne.s32.totalorder %s255, %s257
      %p261 = scmp.eq.s32.totalorder %s27, 0
      %p262 = por %p260, %p261
      %p263 = scmp.ne.s32.totalorder %s255, %s257
      %p264 = scmp.eq.s32.totalorder %s32, 1
      %p265 = por %p263, %p264
      %p266 = scmp.ne.s32.totalorder %s257, %s258
      %p267 = scmp.eq.s32.totalorder %s32, 0
      %p268 = por %p266, %p267
      %p269 = scmp.ne.s32.totalorder %s257, %s258
      %p270 = scmp.eq.s32.totalorder %s33, 1
      %p271 = por %p269, %p270
      %p273 = scmp.ne.s32.totalorder %s258, %s272
      %p274 = scmp.eq.s32.totalorder %s33, 0
      %p275 = por %p273, %p274
      %s277 = sadd.s32 %s276, 1
      %p280 = scmp.eq.s32.totalorder %s27, 1
      %p281 = scmp.ne.s32.totalorder %s276, %s278
      %p282 = scmp.eq.s32.totalorder %s27, 0
      %p283 = por %p281, %p282
      %p284 = scmp.ne.s32.totalorder %s276, %s278
      %p285 = scmp.eq.s32.totalorder %s32, 1
      %p286 = por %p284, %p285
      %p287 = scmp.ne.s32.totalorder %s278, %s279
      %p288 = scmp.eq.s32.totalorder %s32, 0
      %p289 = por %p287, %p288
      %p290 = scmp.ne.s32.totalorder %s278, %s279
      %p291 = scmp.eq.s32.totalorder %s33, 1
      %p292 = por %p290, %p291
      %p294 = scmp.ne.s32.totalorder %s279, %s293
      %p295 = scmp.eq.s32.totalorder %s33, 0
      %p296 = por %p294, %p295
      %s298 = sadd.s32 %s297, 1
      %p301 = scmp.eq.s32.totalorder %s27, 1
      %p302 = scmp.ne.s32.totalorder %s297, %s299
      %p303 = scmp.eq.s32.totalorder %s27, 0
      %p304 = por %p302, %p303
      %p305 = scmp.ne.s32.totalorder %s297, %s299
      %p306 = scmp.eq.s32.totalorder %s32, 1
      %p307 = por %p305, %p306
      %p308 = scmp.ne.s32.totalorder %s299, %s300
      %p309 = scmp.eq.s32.totalorder %s32, 0
      %p310 = por %p308, %p309
      %p311 = scmp.ne.s32.totalorder %s299, %s300
      %p312 = scmp.eq.s32.totalorder %s33, 1
      %p313 = por %p311, %p312
      %p315 = scmp.ne.s32.totalorder %s300, %s314
      %p316 = scmp.eq.s32.totalorder %s33, 0
      %p317 = por %p315, %p316
      %s319 = sadd.s32 %s318, 1
      %p322 = scmp.eq.s32.totalorder %s27, 1
      %p323 = scmp.ne.s32.totalorder %s318, %s320
      %p324 = scmp.eq.s32.totalorder %s27, 0
      %p325 = por %p323, %p324
      %p326 = scmp.ne.s32.totalorder %s318, %s320
      %p327 = scmp.eq.s32.totalorder %s32, 1
      %p328 = por %p326, %p327
      %p329 = scmp.ne.s32.totalorder %s320, %s321
      %p330 = scmp.eq.s32.totalorder %s32, 0
      %p331 = por %p329, %p330
      %p332 = scmp.ne.s32.totalorder %s320, %s321
      %p333 = scmp.eq.s32.totalorder %s33, 1
      %p334 = por %p332, %p333
      %p336 = scmp.ne.s32.totalorder %s321, %s335
      %p337 = scmp.eq.s32.totalorder %s33, 0
      %p338 = por %p336, %p337
      %s340 = sadd.s32 %s339, 1
      %p343 = scmp.eq.s32.totalorder %s27, 1
      %p344 = scmp.ne.s32.totalorder %s339, %s341
      %p345 = scmp.eq.s32.totalorder %s27, 0
      %p346 = por %p344, %p345
      %p347 = scmp.ne.s32.totalorder %s339, %s341
      %p348 = scmp.eq.s32.totalorder %s32, 1
      %p349 = por %p347, %p348
      %p350 = scmp.ne.s32.totalorder %s341, %s342
      %p351 = scmp.eq.s32.totalorder %s32, 0
      %p352 = por %p350, %p351
      %p353 = scmp.ne.s32.totalorder %s341, %s342
      %p354 = scmp.eq.s32.totalorder %s33, 1
      %p355 = por %p353, %p354
      %p357 = scmp.ne.s32.totalorder %s342, %s356
      %p358 = scmp.eq.s32.totalorder %s33, 0
      %p359 = por %p357, %p358
      %s361 = sadd.s32 %s360, 1
      %p364 = scmp.eq.s32.totalorder %s27, 1
      %p365 = scmp.ne.s32.totalorder %s360, %s362
      %p366 = scmp.eq.s32.totalorder %s27, 0
      %p367 = por %p365, %p366
      %p368 = scmp.ne.s32.totalorder %s360, %s362
      %p369 = scmp.eq.s32.totalorder %s32, 1
      %p370 = por %p368, %p369
      %p371 = scmp.ne.s32.totalorder %s362, %s363
      %p372 = scmp.eq.s32.totalorder %s32, 0
      %p373 = por %p371, %p372
      %p374 = scmp.ne.s32.totalorder %s362, %s363
      %p375 = scmp.eq.s32.totalorder %s33, 1
      %p376 = por %p374, %p375
      %p378 = scmp.ne.s32.totalorder %s363, %s377
      %p379 = scmp.eq.s32.totalorder %s33, 0
      %p380 = por %p378, %p379
      %s382 = sadd.s32 %s381, 1
      %p385 = scmp.eq.s32.totalorder %s27, 1
      %p386 = scmp.ne.s32.totalorder %s381, %s383
      %p387 = scmp.eq.s32.totalorder %s27, 0
      %p388 = por %p386, %p387
      %p389 = scmp.ne.s32.totalorder %s381, %s383
      %p390 = scmp.eq.s32.totalorder %s32, 1
      %p391 = por %p389, %p390
      %p392 = scmp.ne.s32.totalorder %s383, %s384
      %p393 = scmp.eq.s32.totalorder %s32, 0
      %p394 = por %p392, %p393
      %p395 = scmp.ne.s32.totalorder %s383, %s384
      %p396 = scmp.eq.s32.totalorder %s33, 1
      %p397 = por %p395, %p396
      %p399 = scmp.ne.s32.totalorder %s384, %s398
      %p400 = scmp.eq.s32.totalorder %s33, 0
      %p401 = por %p399, %p400
      %s403 = sadd.s32 %s402, 1
      %p406 = scmp.eq.s32.totalorder %s27, 1
      %p407 = scmp.ne.s32.totalorder %s402, %s404
      %p408 = scmp.eq.s32.totalorder %s27, 0
      %p409 = por %p407, %p408
      %p410 = scmp.ne.s32.totalorder %s402, %s404
      %p411 = scmp.eq.s32.totalorder %s32, 1
      %p412 = por %p410, %p411
      %p413 = scmp.ne.s32.totalorder %s404, %s405
      %p414 = scmp.eq.s32.totalorder %s32, 0
      %p415 = por %p413, %p414
      %p416 = scmp.ne.s32.totalorder %s404, %s405
      %p417 = scmp.eq.s32.totalorder %s33, 1
      %p418 = por %p416, %p417
      %p420 = scmp.ne.s32.totalorder %s405, %s419
      %p421 = scmp.eq.s32.totalorder %s33, 0
      %p422 = por %p420, %p421
      %s423 = ssub.s32 %s27, %s34
      %p424 = scmp.eq.s32.totalorder %s423, 0
      %s426 = sadd.s32 %s425, 1
      %s427 = scalar_select %p424, %s425, %s426
      %p430 = pneg %p424
      %p431 = scmp.eq.s32.totalorder %s27, 1
      %p432 = por %p430, %p431
      %p433 = scmp.ne.s32.totalorder %s425, %s428
      %p434 = scmp.eq.s32.totalorder %s27, 0
      %p435 = por %p433, %p434
      %p436 = scmp.ne.s32.totalorder %s425, %s428
      %p437 = scmp.eq.s32.totalorder %s32, 1
      %p438 = por %p436, %p437
      %p439 = scmp.ne.s32.totalorder %s428, %s429
      %p440 = scmp.eq.s32.totalorder %s32, 0
      %p441 = por %p439, %p440
      %p442 = scmp.ne.s32.totalorder %s428, %s429
      %p443 = scmp.eq.s32.totalorder %s33, 1
      %p444 = por %p442, %p443
      %p446 = scmp.ne.s32.totalorder %s429, %s445
      %p447 = scmp.eq.s32.totalorder %s33, 0
      %p448 = por %p446, %p447
      %p449 = scmp.le.s32.totalorder 1, %s27
      %p450 = scmp.lt.s32.totalorder %s27, 3
      %p451 = pnand %p449, %p450
      %p452 = pneg %p451
      // Predicated region
      $region9: #{_encode_impl.1} parent=5 // pred_check
        _
      $region10: #{_encode_impl.1} parent=5 // pred_check_branch
        %454 = sbr.rel (%p451) target = $region12
      $region11: #{_encode_impl.1} parent=5 // pred_region
        %s455 = ssub.s32 %s27, 1
        // Predicated region
        $region13: #{_encode_impl.1} parent=11 // pred_check
          %p456 = pneg %p100
        $region14: #{_encode_impl.1} parent=11 // pred_check_branch
          %458 = sbr.rel (%p456) target = $region16
        $region15: #{_encode_impl.1} parent=11 // pred_region
          _
        $region16: #{_encode_impl.1} parent=11 // pred_fallthru
          _
        // Predicated region
        $region17: #{_encode_impl.1} parent=11 // pred_check
          %p459 = pneg %p121
        $region18: #{_encode_impl.1} parent=11 // pred_check_branch
          %461 = sbr.rel (%p459) target = $region20
        $region19: #{_encode_impl.1} parent=11 // pred_region
          _
        $region20: #{_encode_impl.1} parent=11 // pred_fallthru
          _
        // Predicated region
        $region21: #{_encode_impl.1} parent=11 // pred_check
          %p462 = pneg %p142
        $region22: #{_encode_impl.1} parent=11 // pred_check_branch
          %464 = sbr.rel (%p462) target = $region24
        $region23: #{_encode_impl.1} parent=11 // pred_region
          _
        $region24: #{_encode_impl.1} parent=11 // pred_fallthru
          _
        // Predicated region
        $region25: #{_encode_impl.1} parent=11 // pred_check
          %p465 = pneg %p163
        $region26: #{_encode_impl.1} parent=11 // pred_check_branch
          %467 = sbr.rel (%p465) target = $region28
        $region27: #{_encode_impl.1} parent=11 // pred_region
          _
        $region28: #{_encode_impl.1} parent=11 // pred_fallthru
          _
        // Predicated region
        $region29: #{_encode_impl.1} parent=11 // pred_check
          %p468 = pneg %p184
        $region30: #{_encode_impl.1} parent=11 // pred_check_branch
          %470 = sbr.rel (%p468) target = $region32
        $region31: #{_encode_impl.1} parent=11 // pred_region
          _
        $region32: #{_encode_impl.1} parent=11 // pred_fallthru
          _
        // Predicated region
        $region33: #{_encode_impl.1} parent=11 // pred_check
          %p471 = pneg %p205
        $region34: #{_encode_impl.1} parent=11 // pred_check_branch
          %473 = sbr.rel (%p471) target = $region36
        $region35: #{_encode_impl.1} parent=11 // pred_region
          _
        $region36: #{_encode_impl.1} parent=11 // pred_fallthru
          _
        // Predicated region
        $region37: #{_encode_impl.1} parent=11 // pred_check
          %p474 = pneg %p226
        $region38: #{_encode_impl.1} parent=11 // pred_check_branch
          %476 = sbr.rel (%p474) target = $region40
        $region39: #{_encode_impl.1} parent=11 // pred_region
          _
        $region40: #{_encode_impl.1} parent=11 // pred_fallthru
          _
        // Predicated region
        $region41: #{_encode_impl.1} parent=11 // pred_check
          %p477 = pneg %p247
        $region42: #{_encode_impl.1} parent=11 // pred_check_branch
          %479 = sbr.rel (%p477) target = $region44
        $region43: #{_encode_impl.1} parent=11 // pred_region
          _
        $region44: #{_encode_impl.1} parent=11 // pred_fallthru
          _
        // Predicated region
        $region45: #{_encode_impl.1} parent=11 // pred_check
          %p480 = pneg %p268
        $region46: #{_encode_impl.1} parent=11 // pred_check_branch
          %482 = sbr.rel (%p480) target = $region48
        $region47: #{_encode_impl.1} parent=11 // pred_region
          _
        $region48: #{_encode_impl.1} parent=11 // pred_fallthru
          _
        // Predicated region
        $region49: #{_encode_impl.1} parent=11 // pred_check
          %p483 = pneg %p289
        $region50: #{_encode_impl.1} parent=11 // pred_check_branch
          %485 = sbr.rel (%p483) target = $region52
        $region51: #{_encode_impl.1} parent=11 // pred_region
          _
        $region52: #{_encode_impl.1} parent=11 // pred_fallthru
          _
        // Predicated region
        $region53: #{_encode_impl.1} parent=11 // pred_check
          %p486 = pneg %p310
        $region54: #{_encode_impl.1} parent=11 // pred_check_branch
          %488 = sbr.rel (%p486) target = $region56
        $region55: #{_encode_impl.1} parent=11 // pred_region
          _
        $region56: #{_encode_impl.1} parent=11 // pred_fallthru
          _
        // Predicated region
        $region57: #{_encode_impl.1} parent=11 // pred_check
          %p489 = pneg %p331
        $region58: #{_encode_impl.1} parent=11 // pred_check_branch
          %491 = sbr.rel (%p489) target = $region60
        $region59: #{_encode_impl.1} parent=11 // pred_region
          _
        $region60: #{_encode_impl.1} parent=11 // pred_fallthru
          _
        // Predicated region
        $region61: #{_encode_impl.1} parent=11 // pred_check
          %p492 = pneg %p352
        $region62: #{_encode_impl.1} parent=11 // pred_check_branch
          %494 = sbr.rel (%p492) target = $region64
        $region63: #{_encode_impl.1} parent=11 // pred_region
          _
        $region64: #{_encode_impl.1} parent=11 // pred_fallthru
          _
        // Predicated region
        $region65: #{_encode_impl.1} parent=11 // pred_check
          %p495 = pneg %p373
        $region66: #{_encode_impl.1} parent=11 // pred_check_branch
          %497 = sbr.rel (%p495) target = $region68
        $region67: #{_encode_impl.1} parent=11 // pred_region
          _
        $region68: #{_encode_impl.1} parent=11 // pred_fallthru
          _
        // Predicated region
        $region69: #{_encode_impl.1} parent=11 // pred_check
          %p498 = pneg %p394
        $region70: #{_encode_impl.1} parent=11 // pred_check_branch
          %500 = sbr.rel (%p498) target = $region72
        $region71: #{_encode_impl.1} parent=11 // pred_region
          _
        $region72: #{_encode_impl.1} parent=11 // pred_fallthru
          _
        // Predicated region
        $region73: #{_encode_impl.1} parent=11 // pred_check
          %p501 = pneg %p415
        $region74: #{_encode_impl.1} parent=11 // pred_check_branch
          %503 = sbr.rel (%p501) target = $region76
        $region75: #{_encode_impl.1} parent=11 // pred_region
          _
        $region76: #{_encode_impl.1} parent=11 // pred_fallthru
          _
      $region12: #{_encode_impl.1} parent=5 // pred_fallthru
        _
      %p504 = scmp.lt.s32.totalorder %s27, 2
      // Predicated region
      $region77: #{_encode_impl.1} parent=5 // pred_check
        %p505 = pneg %p504
      $region78: #{_encode_impl.1} parent=5 // pred_check_branch
        %507 = sbr.rel (%p505) target = $region80
      $region79: #{_encode_impl.1} parent=5 // pred_region
        // Predicated region
        $region81: #{_encode_impl.1} parent=79 // pred_check
          %p508 = pneg %p47
        $region82: #{_encode_impl.1} parent=79 // pred_check_branch
          %510 = sbr.rel (%p508) target = $region84
        $region83: #{_encode_impl.1} parent=79 // pred_region
          %p511 = scmp.lt.s32.totalorder %s27, 1
          %s512 = scalar_select %p511, %s27, 1
          %s513 = smul.addr %s512, 8
          %s514 = scalar_lea.vmem %s0, %s513
        $region84: #{_encode_impl.1} parent=79 // pred_fallthru
          _
        // Predicated region
        $region85: #{_encode_impl.1} parent=79 // pred_check
          %p515 = pneg %p73
        $region86: #{_encode_impl.1} parent=79 // pred_check_branch
          %517 = sbr.rel (%p515) target = $region88
        $region87: #{_encode_impl.1} parent=79 // pred_region
          %p518 = scmp.lt.s32.totalorder %s27, 1
          %s519 = scalar_select %p518, %s27, 1
          %s520 = scalar_lea.vmem %s1, %s519
        $region88: #{_encode_impl.1} parent=79 // pred_fallthru
          _
      $region80: #{_encode_impl.1} parent=5 // pred_fallthru
        _
      %p521 = scmp.le.s32.totalorder 1, %s27
      %p522 = scmp.lt.s32.totalorder %s27, 3
      %p523 = pnand %p521, %p522
      %p524 = pneg %p523
      // Predicated region
      $region89: #{_encode_impl.1} parent=5 // pred_check
        _
      $region90: #{_encode_impl.1} parent=5 // pred_check_branch
        %526 = sbr.rel (%p523) target = $region92
      $region91: #{_encode_impl.1} parent=5 // pred_region
        %s527 = ssub.s32 %s27, 1
        %p528 = scmp.lt.s32.totalorder %s32, 1
        %s529 = scalar_select %p528, %s32, 1
        %s530 = smul.addr %s529, 8
        %s531 = scalar_lea.vmem %s0, %s530
        %p532 = pneg %p53
        %p533 = pneg %p50
        %p534 = scmp.lt.s32.totalorder %s32, 1
        %s535 = scalar_select %p534, %s32, 1
        %s536 = scalar_lea.vmem %s1, %s535
        %p537 = pneg %p79
        %p538 = pneg %p76
        %p539 = pneg %p100
        %p540 = pneg %p97
        %p541 = pneg %p121
        %p542 = pneg %p118
        %p543 = pneg %p142
        %p544 = pneg %p139
        %p545 = pneg %p163
        %p546 = pneg %p160
        %p547 = pneg %p184
        %p548 = pneg %p181
        %p549 = pneg %p205
        %p550 = pneg %p202
        %p551 = pneg %p226
        %p552 = pneg %p223
        %p553 = pneg %p247
        %p554 = pneg %p244
        %p555 = pneg %p268
        %p556 = pneg %p265
        %p557 = pneg %p289
        %p558 = pneg %p286
        %p559 = pneg %p310
        %p560 = pneg %p307
        %p561 = pneg %p331
        %p562 = pneg %p328
        %p563 = pneg %p352
        %p564 = pneg %p349
        %p565 = pneg %p373
        %p566 = pneg %p370
        %p567 = pneg %p394
        %p568 = pneg %p391
        %p569 = pneg %p415
        %p570 = pneg %p412
        %p571 = pneg %p441
        %p572 = pneg %p438
        %s573 = sand.u32 %s428, 1
        %s574 = scalar_lea.sflag [#allocation3], %s573
        %s575 = sand.u32 %s428, 1
        %s576 = scalar_lea.vmem [#allocation2], %s575
        %p577 = scmp.lt.s32.totalorder %s32, 1
        %s578 = scalar_select %p577, %s32, 1
        %s579 = smul.addr %s578, 8
        %s580 = scalar_lea.vmem %s0, %s579
        %p581 = scmp.lt.s32.totalorder %s32, 1
        %s582 = scalar_select %p581, %s32, 1
        %s583 = scalar_lea.vmem %s1, %s582
        %v584 = vld [vmem:[%s580] sm:$0xff]
        %v585 = vld [vmem:[%s2] sm:$0x1]
        %v586 = vld [vmem:[%s3] sm:$0x1]
        %vm587 = vcmask 261120
        %v588 = vsel %vm587, %v584, 0.0
        %589 = vadd.xlane.f32.xlu0 %v588
        %v590 = vpop.xlane.xlu0 %589
        %v591 = vrcp.pop 32.0
        %v592 = vmul.f32 32.0, %v591
        %v593 = vsub.f32 1.0, %v592
        %v594 = vmul.f32 %v591, %v593
        %v595 = vadd.f32 %v591, %v594
        %vm596 = vweird.f32 %v591
        %v597 = vsel %vm596, %v591, %v595
        %v598 = vmul.f32 %v590, %v597
        %v599 = vsub.f32 %v584, %v598
        %v600 = vmul.f32 %v599, %v599
        %v601 = vsel %vm587, %v600, 0.0
        %602 = vadd.xlane.f32.xlu0 %v601
        %v603 = vpop.xlane.xlu0 %602
        %v604 = vmul.f32 %v603, %v597
        %v605 = vadd.f32 %v604, 1e-05
        %v606 = vrsqrt.pop %v605
        %v607 = vmul.f32 %v606, %v605
        %v608 = vmul.f32 %v607, %v606
        %v609 = vmul.f32 0.5, %v608
        %v610 = vsub.f32 1.5, %v609
        %v611 = vmul.f32 %v606, %v610
        %vm612 = vweird.f32 %v605
        %vm613 = vweird.f32 %v606
        %vm614 = vmor %vm612, %vm613
        %v615 = vsel %vm614, %v606, %v611
        %v616 = vmul.f32 %v599, %v615
        %v618 = vperm.slane %v585, 0
        %v620 = vmul.f32 %v616, %v618
        %v622 = vperm.slane %v586, 0
        %v624 = vadd.f32 %v620, %v622
        %v625 = vld [vmem:[%s583] sm:$0x1]
        %v626 = vld [vmem:[%s4] sm:$0xff]
        %v627 = vld [vmem:[%s4 + $0x8] sm:$0xff]
        %v628 = vld [vmem:[%s4 + $0x10] sm:$0xff]
        %v629 = vld [vmem:[%s4 + $0x18] sm:$0xff]
        %v630 = vld [vmem:[%s5] sm:$0x1]
        %v631 = vld [vmem:[%s6] sm:$0xff]
        %v632 = vld [vmem:[%s6 + $0x8] sm:$0xff]
        %v633 = vld [vmem:[%s6 + $0x10] sm:$0xff]
        %v634 = vld [vmem:[%s6 + $0x18] sm:$0xff]
        %v635 = vld [vmem:[%s7] sm:$0x1]
        %v637 = vperm.slane %v630, 0
        %v640 = vsel %vm587, %v624, 0
        %642 = vmatpush.msra.mxu0 0.0
        %643 = vmatpush.msra.mxu0 0.0
        %644 = vmatpush.msra.mxu0 0.0
        %645 = vmatpush.msra.mxu0 0.0
        %646 = vmatpush.msra.mxu0 0.0
        %647 = vmatpush.msra.mxu0 0.0
        %648 = vmatpush.msra.mxu0 0.0
        %649 = vmatpush.msra.mxu0 0.0
        %650 = vmatpush.msra.mxu0 0.0
        %651 = vmatpush.msra.mxu0 0.0
        %652 = vmatpush.msra.mxu0 0.0
        %653 = vmatpush.msra.mxu0 0.0
        %654 = vmatpush.msra.mxu0 %v629
        %655 = vmatpush.msra.mxu0 %v628
        %656 = vmatpush.msra.mxu0 %v627
        %657 = vmatpush.msra.mxu0 %v626
        %658 = vmatmul.f32.gmra.mxu0 %v640
        %v659 = vpop.f32.mrf.mxu0
        %v660 = vadd.f32 %v637, %v659
        %661 = vdwg.mxu0
        %663 = vrot.lane.b32.xlu0 %v660, 96
        %v664 = vpop.permute.xlu0 %663
        %vm665 = vcmask 130048
        %v666 = vsel %vm665, %v660, 0
        %v668 = vsel %vm665, %v664, 0
        %670 = vmatpush.xpose.msra.mxu0 0.0
        %671 = vmatpush.xpose.msra.mxu0 0.0
        %672 = vmatpush.xpose.msra.mxu0 0.0
        %673 = vmatpush.xpose.msra.mxu0 0.0
        %674 = vmatpush.xpose.msra.mxu0 0.0
        %675 = vmatpush.xpose.msra.mxu0 0.0
        %676 = vmatpush.xpose.msra.mxu0 0.0
        %677 = vmatpush.xpose.msra.mxu0 0.0
        %678 = vmatpush.xpose.msra.mxu0 0.0
        %679 = vmatpush.xpose.msra.mxu0 0.0
        %680 = vmatpush.xpose.msra.mxu0 0.0
        %681 = vmatpush.xpose.msra.mxu0 0.0
        %682 = vmatpush.xpose.msra.mxu0 0.0
        %683 = vmatpush.xpose.msra.mxu0 0.0
        %684 = vmatpush.xpose.msra.mxu0 0.0
        %685 = vmatpush.xpose.msra.mxu0 %v668
        %686 = vmatmul.f32.gmra.mxu0 %v666
        %v687 = vpop.f32.mrf.mxu0
        %v688 = vadd.f32 0.0, %v687
        %689 = vdwg.mxu0
        %v690 = vmul.f32 %v688, 0.25
        %v692 = vperm.slane %v625, 0
        %v694 = vadd.f32 %v690, %v692
        %vm695 = vcmask 64512
        %v696 = vsel %vm695, %v694, -inf
        %697 = vmax.xlane.f32.xlu0 %v696
        %v698 = vpop.xlane.xlu0 %697
        %v699 = vsub.f32 %v694, %v698
        %v700 = vmul.f32 %v699, 1.442695
        %v701 = vpow.pop %v700
        %v702 = vsel %vm695, %v701, 0.0
        %703 = vadd.xlane.f32.xlu0 %v702
        %v704 = vpop.xlane.xlu0 %703
        %v705 = vrcp.pop %v704
        %v706 = vmul.f32 %v701, %v705
        %707 = vrot.lane.b32.xlu0 %v660, 64
        %v708 = vpop.permute.xlu0 %707
        %v711 = vsel %vm695, %v706, 0
        %713 = vmatpush.msra.mxu0 0.0
        %714 = vmatpush.msra.mxu0 0.0
        %715 = vmatpush.msra.mxu0 0.0
        %716 = vmatpush.msra.mxu0 0.0
        %717 = vmatpush.msra.mxu0 0.0
        %718 = vmatpush.msra.mxu0 0.0
        %719 = vmatpush.msra.mxu0 0.0
        %720 = vmatpush.msra.mxu0 0.0
        %721 = vmatpush.msra.mxu0 0.0
        %722 = vmatpush.msra.mxu0 0.0
        %723 = vmatpush.msra.mxu0 0.0
        %724 = vmatpush.msra.mxu0 0.0
        %725 = vmatpush.msra.mxu0 0.0
        %726 = vmatpush.msra.mxu0 0.0
        %727 = vmatpush.msra.mxu0 0.0
        %728 = vmatpush.msra.mxu0 %v708
        %729 = vmatmul.f32.gmra.mxu0 %v711
        %v730 = vpop.f32.mrf.mxu0
        %v731 = vadd.f32 0.0, %v730
        %732 = vdwg.mxu0
        %733 = vrot.lane.b32.xlu0 %v660, 112
        %v734 = vpop.permute.xlu0 %733
        %735 = vrot.lane.b32.xlu0 %v660, 80
        %v736 = vpop.permute.xlu0 %735
        %v737 = vsel %vm665, %v734, 0
        %v739 = vsel %vm665, %v736, 0
        %741 = vmatpush.xpose.msra.mxu0 0.0
        %742 = vmatpush.xpose.msra.mxu0 0.0
        %743 = vmatpush.xpose.msra.mxu0 0.0
        %744 = vmatpush.xpose.msra.mxu0 0.0
        %745 = vmatpush.xpose.msra.mxu0 0.0
        %746 = vmatpush.xpose.msra.mxu0 0.0
        %747 = vmatpush.xpose.msra.mxu0 0.0
        %748 = vmatpush.xpose.msra.mxu0 0.0
        %749 = vmatpush.xpose.msra.mxu0 0.0
        %750 = vmatpush.xpose.msra.mxu0 0.0
        %751 = vmatpush.xpose.msra.mxu0 0.0
        %752 = vmatpush.xpose.msra.mxu0 0.0
        %753 = vmatpush.xpose.msra.mxu0 0.0
        %754 = vmatpush.xpose.msra.mxu0 0.0
        %755 = vmatpush.xpose.msra.mxu0 0.0
        %756 = vmatpush.xpose.msra.mxu0 %v739
        %757 = vmatmul.f32.gmra.mxu0 %v737
        %v758 = vpop.f32.mrf.mxu0
        %v759 = vadd.f32 0.0, %v758
        %760 = vdwg.mxu0
        %v761 = vmul.f32 %v759, 0.25
        %v762 = vadd.f32 %v761, %v692
        %v763 = vsel %vm695, %v762, -inf
        %764 = vmax.xlane.f32.xlu0 %v763
        %v765 = vpop.xlane.xlu0 %764
        %v766 = vsub.f32 %v762, %v765
        %v767 = vmul.f32 %v766, 1.442695
        %v768 = vpow.pop %v767
        %v769 = vsel %vm695, %v768, 0.0
        %770 = vadd.xlane.f32.xlu0 %v769
        %v771 = vpop.xlane.xlu0 %770
        %v772 = vrcp.pop %v771
        %v773 = vmul.f32 %v768, %v772
        %774 = vrot.lane.b32.xlu0 %v660, 48
        %v775 = vpop.permute.xlu0 %774
        %v778 = vsel %vm695, %v773, 0
        %780 = vmatpush.msra.mxu0 0.0
        %781 = vmatpush.msra.mxu0 0.0
        %782 = vmatpush.msra.mxu0 0.0
        %783 = vmatpush.msra.mxu0 0.0
        %784 = vmatpush.msra.mxu0 0.0
        %785 = vmatpush.msra.mxu0 0.0
        %786 = vmatpush.msra.mxu0 0.0
        %787 = vmatpush.msra.mxu0 0.0
        %788 = vmatpush.msra.mxu0 0.0
        %789 = vmatpush.msra.mxu0 0.0
        %790 = vmatpush.msra.mxu0 0.0
        %791 = vmatpush.msra.mxu0 0.0
        %792 = vmatpush.msra.mxu0 0.0
        %793 = vmatpush.msra.mxu0 0.0
        %794 = vmatpush.msra.mxu0 0.0
        %795 = vmatpush.msra.mxu0 %v775
        %796 = vmatmul.f32.gmra.mxu0 %v778
        %v797 = vpop.f32.mrf.mxu0
        %v798 = vadd.f32 0.0, %v797
        %799 = vdwg.mxu0
        %v801 = vsel %vm665, %v798, 0
        %803 = vmatpush.msra.mxu0 0.0
        %804 = vmatpush.msra.mxu0 0.0
        %805 = vmatpush.msra.mxu0 0.0
        %806 = vmatpush.msra.mxu0 0.0
        %807 = vmatpush.msra.mxu0 0.0
        %808 = vmatpush.msra.mxu0 0.0
        %809 = vmatpush.msra.mxu0 0.0
        %810 = vmatpush.msra.mxu0 0.0
        %811 = vmatpush.msra.mxu0 0.0
        %812 = vmatpush.msra.mxu0 0.0
        %813 = vmatpush.msra.mxu0 0.0
        %814 = vmatpush.msra.mxu0 0.0
        %815 = vmatpush.msra.mxu0 0.0
        %816 = vmatpush.msra.mxu0 0.0
        %817 = vmatpush.msra.mxu0 %v634
        %818 = vmatpush.msra.mxu0 %v633
        %819 = vmatmul.f32.gmra.mxu0 %v801
        %v820 = vpop.f32.mrf.mxu0
        %v821 = vadd.f32 0.0, %v820
        %822 = vdwg.mxu0
        %v824 = vsel %vm665, %v731, 0
        %826 = vmatpush.msra.mxu0 0.0
        %827 = vmatpush.msra.mxu0 0.0
        %828 = vmatpush.msra.mxu0 0.0
        %829 = vmatpush.msra.mxu0 0.0
        %830 = vmatpush.msra.mxu0 0.0
        %831 = vmatpush.msra.mxu0 0.0
        %832 = vmatpush.msra.mxu0 0.0
        %833 = vmatpush.msra.mxu0 0.0
        %834 = vmatpush.msra.mxu0 0.0
        %835 = vmatpush.msra.mxu0 0.0
        %836 = vmatpush.msra.mxu0 0.0
        %837 = vmatpush.msra.mxu0 0.0
        %838 = vmatpush.msra.mxu0 0.0
        %839 = vmatpush.msra.mxu0 0.0
        %840 = vmatpush.msra.mxu0 %v632
        %841 = vmatpush.msra.mxu0 %v631
        %842 = vmatmul.f32.gmra.mxu0 %v824
        %v843 = vpop.f32.mrf.mxu0
        %v844 = vadd.f32 %v821, %v843
        %845 = vdwg.mxu0
        %v846 = vadd.f32 %v624, %v844
        %v848 = vperm.slane %v635, 0
        %v850 = vadd.f32 %v846, %v848
        %v851 = vld [vmem:[%s8] sm:$0x1]
        %v852 = vld [vmem:[%s9] sm:$0x1]
        %v853 = vsel %vm587, %v850, 0.0
        %854 = vadd.xlane.f32.xlu0 %v853
        %v855 = vpop.xlane.xlu0 %854
        %v856 = vmul.f32 %v855, %v597
        %v857 = vsub.f32 %v850, %v856
        %v858 = vmul.f32 %v857, %v857
        %v859 = vsel %vm587, %v858, 0.0
        %860 = vadd.xlane.f32.xlu0 %v859
        %v861 = vpop.xlane.xlu0 %860
        %v862 = vmul.f32 %v861, %v597
        %v863 = vadd.f32 %v862, 1e-05
        %v864 = vrsqrt.pop %v863
        %v865 = vmul.f32 %v864, %v863
        %v866 = vmul.f32 %v865, %v864
        %v867 = vmul.f32 0.5, %v866
        %v868 = vsub.f32 1.5, %v867
        %v869 = vmul.f32 %v864, %v868
        %vm870 = vweird.f32 %v863
        %vm871 = vweird.f32 %v864
        %vm872 = vmor %vm870, %vm871
        %v873 = vsel %vm872, %v864, %v869
        %v874 = vmul.f32 %v857, %v873
        %v876 = vperm.slane %v851, 0
        %v878 = vmul.f32 %v874, %v876
        %v880 = vperm.slane %v852, 0
        %v882 = vadd.f32 %v878, %v880
        %v883 = vld [vmem:[%s10] sm:$0xff]
        %v884 = vld [vmem:[%s10 + $0x8] sm:$0xff]
        %v885 = vld [vmem:[%s10 + $0x10] sm:$0xff]
        %v886 = vld [vmem:[%s10 + $0x18] sm:$0xff]
        %v887 = vld [vmem:[%s11] sm:$0x1]
        %v889 = vperm.slane %v887, 0
        %v892 = vsel %vm587, %v882, 0
        %894 = vmatpush.msra.mxu0 0.0
        %895 = vmatpush.msra.mxu0 0.0
        %896 = vmatpush.msra.mxu0 0.0
        %897 = vmatpush.msra.mxu0 0.0
        %898 = vmatpush.msra.mxu0 0.0
        %899 = vmatpush.msra.mxu0 0.0
        %900 = vmatpush.msra.mxu0 0.0
        %901 = vmatpush.msra.mxu0 0.0
        %902 = vmatpush.msra.mxu0 0.0
        %903 = vmatpush.msra.mxu0 0.0
        %904 = vmatpush.msra.mxu0 0.0
        %905 = vmatpush.msra.mxu0 0.0
        %906 = vmatpush.msra.mxu0 %v886
        %907 = vmatpush.msra.mxu0 %v885
        %908 = vmatpush.msra.mxu0 %v884
        %909 = vmatpush.msra.mxu0 %v883
        %910 = vmatmul.f32.gmra.mxu0 %v892
        %v911 = vpop.f32.mrf.mxu0
        %v912 = vadd.f32 %v889, %v911
        %913 = vdwg.mxu0
        %v914 = vmul.f32 %v912, %v912
        %v915 = vmul.f32 %v912, %v914
        %v916 = vmul.f32 %v915, 0.044715
        %v917 = vadd.f32 %v912, %v916
        %v918 = vmul.f32 %v917, 0.7978846
        %v919 = vtanh.pop %v918
        %v920 = vadd.f32 %v919, 1.0
        %v921 = vmul.f32 %v920, 0.5
        %v922 = vmul.f32 %v912, %v921
        %v923 = vld [vmem:[%s12] sm:$0xff]
        %v924 = vld [vmem:[%s12 + $0x8] sm:$0xff]
        %v925 = vld [vmem:[%s12 + $0x10] sm:$0xff]
        %v926 = vld [vmem:[%s12 + $0x18] sm:$0xff]
        %v927 = vld [vmem:[%s12 + $0x20] sm:$0xff]
        %v928 = vld [vmem:[%s12 + $0x28] sm:$0xff]
        %v929 = vld [vmem:[%s12 + $0x30] sm:$0xff]
        %v930 = vld [vmem:[%s12 + $0x38] sm:$0xff]
        %v931 = vld [vmem:[%s13] sm:$0x1]
        %v933 = vperm.slane %v931, 0
        %vm935 = vcmask 523264
        %v937 = vsel %vm935, %v922, 0
        %939 = vmatpush.msra.mxu0 0.0
        %940 = vmatpush.msra.mxu0 0.0
        %941 = vmatpush.msra.mxu0 0.0
        %942 = vmatpush.msra.mxu0 0.0
        %943 = vmatpush.msra.mxu0 0.0
        %944 = vmatpush.msra.mxu0 0.0
        %945 = vmatpush.msra.mxu0 0.0
        %946 = vmatpush.msra.mxu0 0.0
        %947 = vmatpush.msra.mxu0 %v930
        %948 = vmatpush.msra.mxu0 %v929
        %949 = vmatpush.msra.mxu0 %v928
        %950 = vmatpush.msra.mxu0 %v927
        %951 = vmatpush.msra.mxu0 %v926
        %952 = vmatpush.msra.mxu0 %v925
        %953 = vmatpush.msra.mxu0 %v924
        %954 = vmatpush.msra.mxu0 %v923
        %955 = vmatmul.f32.gmra.mxu0 %v937
        %v956 = vpop.f32.mrf.mxu0
        %v957 = vadd.f32 %v933, %v956
        %958 = vdwg.mxu0
        %v959 = vadd.f32 %v882, %v957
        %v960 = vld [vmem:[%s14] sm:$0x1]
        %v961 = vld [vmem:[%s15] sm:$0x1]
        %v962 = vsel %vm587, %v959, 0.0
        %963 = vadd.xlane.f32.xlu0 %v962
        %v964 = vpop.xlane.xlu0 %963
        %v965 = vmul.f32 %v964, %v597
        %v966 = vsub.f32 %v959, %v965
        %v967 = vmul.f32 %v966, %v966
        %v968 = vsel %vm587, %v967, 0.0
        %969 = vadd.xlane.f32.xlu0 %v968
        %v970 = vpop.xlane.xlu0 %969
        %v971 = vmul.f32 %v970, %v597
        %v972 = vadd.f32 %v971, 1e-05
        %v973 = vrsqrt.pop %v972
        %v974 = vmul.f32 %v973, %v972
        %v975 = vmul.f32 %v974, %v973
        %v976 = vmul.f32 0.5, %v975
        %v977 = vsub.f32 1.5, %v976
        %v978 = vmul.f32 %v973, %v977
        %vm979 = vweird.f32 %v972
        %vm980 = vweird.f32 %v973
        %vm981 = vmor %vm979, %vm980
        %v982 = vsel %vm981, %v973, %v978
        %v983 = vmul.f32 %v966, %v982
        %v985 = vperm.slane %v960, 0
        %v987 = vmul.f32 %v983, %v985
        %v989 = vperm.slane %v961, 0
        %v991 = vadd.f32 %v987, %v989
        %s992 = scalar_lea.vmem %s4, 32
        %v993 = vld [vmem:[%s992] sm:$0xff]
        %v994 = vld [vmem:[%s992 + $0x8] sm:$0xff]
        %v995 = vld [vmem:[%s992 + $0x10] sm:$0xff]
        %v996 = vld [vmem:[%s992 + $0x18] sm:$0xff]
        %s997 = scalar_lea.vmem %s5, 1
        %v998 = vld [vmem:[%s997] sm:$0x1]
        %s999 = scalar_lea.vmem %s6, 32
        %v1000 = vld [vmem:[%s999] sm:$0xff]
        %v1001 = vld [vmem:[%s999 + $0x8] sm:$0xff]
        %v1002 = vld [vmem:[%s999 + $0x10] sm:$0xff]
        %v1003 = vld [vmem:[%s999 + $0x18] sm:$0xff]
        %s1004 = scalar_lea.vmem %s7, 1
        %v1005 = vld [vmem:[%s1004] sm:$0x1]
        %v1007 = vperm.slane %v998, 0
        %v1010 = vsel %vm587, %v991, 0
        %1012 = vmatpush.msra.mxu0 0.0
        %1013 = vmatpush.msra.mxu0 0.0
        %1014 = vmatpush.msra.mxu0 0.0
        %1015 = vmatpush.msra.mxu0 0.0
        %1016 = vmatpush.msra.mxu0 0.0
        %1017 = vmatpush.msra.mxu0 0.0
        %1018 = vmatpush.msra.mxu0 0.0
        %1019 = vmatpush.msra.mxu0 0.0
        %1020 = vmatpush.msra.mxu0 0.0
        %1021 = vmatpush.msra.mxu0 0.0
        %1022 = vmatpush.msra.mxu0 0.0
        %1023 = vmatpush.msra.mxu0 0.0
        %1024 = vmatpush.msra.mxu0 %v996
        %1025 = vmatpush.msra.mxu0 %v995
        %1026 = vmatpush.msra.mxu0 %v994
        %1027 = vmatpush.msra.mxu0 %v993
        %1028 = vmatmul.f32.gmra.mxu0 %v1010
        %v1029 = vpop.f32.mrf.mxu0
        %v1030 = vadd.f32 %v1007, %v1029
        %1031 = vdwg.mxu0
        %1033 = vrot.lane.b32.xlu0 %v1030, 96
        %v1034 = vpop.permute.xlu0 %1033
        %v1035 = vsel %vm665, %v1030, 0
        %v1037 = vsel %vm665, %v1034, 0
        %1039 = vmatpush.xpose.msra.mxu0 0.0
        %1040 = vmatpush.xpose.msra.mxu0 0.0
        %1041 = vmatpush.xpose.msra.mxu0 0.0
        %1042 = vmatpush.xpose.msra.mxu0 0.0
        %1043 = vmatpush.xpose.msra.mxu0 0.0
        %1044 = vmatpush.xpose.msra.mxu0 0.0
        %1045 = vmatpush.xpose.msra.mxu0 0.0
        %1046 = vmatpush.xpose.msra.mxu0 0.0
        %1047 = vmatpush.xpose.msra.mxu0 0.0
        %1048 = vmatpush.xpose.msra.mxu0 0.0
        %1049 = vmatpush.xpose.msra.mxu0 0.0
        %1050 = vmatpush.xpose.msra.mxu0 0.0
        %1051 = vmatpush.xpose.msra.mxu0 0.0
        %1052 = vmatpush.xpose.msra.mxu0 0.0
        %1053 = vmatpush.xpose.msra.mxu0 0.0
        %1054 = vmatpush.xpose.msra.mxu0 %v1037
        %1055 = vmatmul.f32.gmra.mxu0 %v1035
        %v1056 = vpop.f32.mrf.mxu0
        %v1057 = vadd.f32 0.0, %v1056
        %1058 = vdwg.mxu0
        %v1059 = vmul.f32 %v1057, 0.25
        %v1060 = vadd.f32 %v1059, %v692
        %v1061 = vsel %vm695, %v1060, -inf
        %1062 = vmax.xlane.f32.xlu0 %v1061
        %v1063 = vpop.xlane.xlu0 %1062
        %v1064 = vsub.f32 %v1060, %v1063
        %v1065 = vmul.f32 %v1064, 1.442695
        %v1066 = vpow.pop %v1065
        %v1067 = vsel %vm695, %v1066, 0.0
        %1068 = vadd.xlane.f32.xlu0 %v1067
        %v1069 = vpop.xlane.xlu0 %1068
        %v1070 = vrcp.pop %v1069
        %v1071 = vmul.f32 %v1066, %v1070
        %1072 = vrot.lane.b32.xlu0 %v1030, 64
        %v1073 = vpop.permute.xlu0 %1072
        %v1076 = vsel %vm695, %v1071, 0
        %1078 = vmatpush.msra.mxu0 0.0
        %1079 = vmatpush.msra.mxu0 0.0
        %1080 = vmatpush.msra.mxu0 0.0
        %1081 = vmatpush.msra.mxu0 0.0
        %1082 = vmatpush.msra.mxu0 0.0
        %1083 = vmatpush.msra.mxu0 0.0
        %1084 = vmatpush.msra.mxu0 0.0
        %1085 = vmatpush.msra.mxu0 0.0
        %1086 = vmatpush.msra.mxu0 0.0
        %1087 = vmatpush.msra.mxu0 0.0
        %1088 = vmatpush.msra.mxu0 0.0
        %1089 = vmatpush.msra.mxu0 0.0
        %1090 = vmatpush.msra.mxu0 0.0
        %1091 = vmatpush.msra.mxu0 0.0
        %1092 = vmatpush.msra.mxu0 0.0
        %1093 = vmatpush.msra.mxu0 %v1073
        %1094 = vmatmul.f32.gmra.mxu0 %v1076
        %v1095 = vpop.f32.mrf.mxu0
        %v1096 = vadd.f32 0.0, %v1095
        %1097 = vdwg.mxu0
        %1098 = vrot.lane.b32.xlu0 %v1030, 112
        %v1099 = vpop.permute.xlu0 %1098
        %1100 = vrot.lane.b32.xlu0 %v1030, 80
        %v1101 = vpop.permute.xlu0 %1100
        %v1102 = vsel %vm665, %v1099, 0
        %v1104 = vsel %vm665, %v1101, 0
        %1106 = vmatpush.xpose.msra.mxu0 0.0
        %1107 = vmatpush.xpose.msra.mxu0 0.0
        %1108 = vmatpush.xpose.msra.mxu0 0.0
        %1109 = vmatpush.xpose.msra.mxu0 0.0
        %1110 = vmatpush.xpose.msra.mxu0 0.0
        %1111 = vmatpush.xpose.msra.mxu0 0.0
        %1112 = vmatpush.xpose.msra.mxu0 0.0
        %1113 = vmatpush.xpose.msra.mxu0 0.0
        %1114 = vmatpush.xpose.msra.mxu0 0.0
        %1115 = vmatpush.xpose.msra.mxu0 0.0
        %1116 = vmatpush.xpose.msra.mxu0 0.0
        %1117 = vmatpush.xpose.msra.mxu0 0.0
        %1118 = vmatpush.xpose.msra.mxu0 0.0
        %1119 = vmatpush.xpose.msra.mxu0 0.0
        %1120 = vmatpush.xpose.msra.mxu0 0.0
        %1121 = vmatpush.xpose.msra.mxu0 %v1104
        %1122 = vmatmul.f32.gmra.mxu0 %v1102
        %v1123 = vpop.f32.mrf.mxu0
        %v1124 = vadd.f32 0.0, %v1123
        %1125 = vdwg.mxu0
        %v1126 = vmul.f32 %v1124, 0.25
        %v1127 = vadd.f32 %v1126, %v692
        %v1128 = vsel %vm695, %v1127, -inf
        %1129 = vmax.xlane.f32.xlu0 %v1128
        %v1130 = vpop.xlane.xlu0 %1129
        %v1131 = vsub.f32 %v1127, %v1130
        %v1132 = vmul.f32 %v1131, 1.442695
        %v1133 = vpow.pop %v1132
        %v1134 = vsel %vm695, %v1133, 0.0
        %1135 = vadd.xlane.f32.xlu0 %v1134
        %v1136 = vpop.xlane.xlu0 %1135
        %v1137 = vrcp.pop %v1136
        %v1138 = vmul.f32 %v1133, %v1137
        %1139 = vrot.lane.b32.xlu0 %v1030, 48
        %v1140 = vpop.permute.xlu0 %1139
        %v1143 = vsel %vm695, %v1138, 0
        %1145 = vmatpush.msra.mxu0 0.0
        %1146 = vmatpush.msra.mxu0 0.0
        %1147 = vmatpush.msra.mxu0 0.0
        %1148 = vmatpush.msra.mxu0 0.0
        %1149 = vmatpush.msra.mxu0 0.0
        %1150 = vmatpush.msra.mxu0 0.0
        %1151 = vmatpush.msra.mxu0 0.0
        %1152 = vmatpush.msra.mxu0 0.0
        %1153 = vmatpush.msra.mxu0 0.0
        %1154 = vmatpush.msra.mxu0 0.0
        %1155 = vmatpush.msra.mxu0 0.0
        %1156 = vmatpush.msra.mxu0 0.0
        %1157 = vmatpush.msra.mxu0 0.0
        %1158 = vmatpush.msra.mxu0 0.0
        %1159 = vmatpush.msra.mxu0 0.0
        %1160 = vmatpush.msra.mxu0 %v1140
        %1161 = vmatmul.f32.gmra.mxu0 %v1143
        %v1162 = vpop.f32.mrf.mxu0
        %v1163 = vadd.f32 0.0, %v1162
        %1164 = vdwg.mxu0
        %v1166 = vsel %vm665, %v1163, 0
        %1168 = vmatpush.msra.mxu0 0.0
        %1169 = vmatpush.msra.mxu0 0.0
        %1170 = vmatpush.msra.mxu0 0.0
        %1171 = vmatpush.msra.mxu0 0.0
        %1172 = vmatpush.msra.mxu0 0.0
        %1173 = vmatpush.msra.mxu0 0.0
        %1174 = vmatpush.msra.mxu0 0.0
        %1175 = vmatpush.msra.mxu0 0.0
        %1176 = vmatpush.msra.mxu0 0.0
        %1177 = vmatpush.msra.mxu0 0.0
        %1178 = vmatpush.msra.mxu0 0.0
        %1179 = vmatpush.msra.mxu0 0.0
        %1180 = vmatpush.msra.mxu0 0.0
        %1181 = vmatpush.msra.mxu0 0.0
        %1182 = vmatpush.msra.mxu0 %v1003
        %1183 = vmatpush.msra.mxu0 %v1002
        %1184 = vmatmul.f32.gmra.mxu0 %v1166
        %v1185 = vpop.f32.mrf.mxu0
        %v1186 = vadd.f32 0.0, %v1185
        %1187 = vdwg.mxu0
        %v1189 = vsel %vm665, %v1096, 0
        %1191 = vmatpush.msra.mxu0 0.0
        %1192 = vmatpush.msra.mxu0 0.0
        %1193 = vmatpush.msra.mxu0 0.0
        %1194 = vmatpush.msra.mxu0 0.0
        %1195 = vmatpush.msra.mxu0 0.0
        %1196 = vmatpush.msra.mxu0 0.0
        %1197 = vmatpush.msra.mxu0 0.0
        %1198 = vmatpush.msra.mxu0 0.0
        %1199 = vmatpush.msra.mxu0 0.0
        %1200 = vmatpush.msra.mxu0 0.0
        %1201 = vmatpush.msra.mxu0 0.0
        %1202 = vmatpush.msra.mxu0 0.0
        %1203 = vmatpush.msra.mxu0 0.0
        %1204 = vmatpush.msra.mxu0 0.0
        %1205 = vmatpush.msra.mxu0 %v1001
        %1206 = vmatpush.msra.mxu0 %v1000
        %1207 = vmatmul.f32.gmra.mxu0 %v1189
        %v1208 = vpop.f32.mrf.mxu0
        %v1209 = vadd.f32 %v1186, %v1208
        %1210 = vdwg.mxu0
        %v1211 = vadd.f32 %v991, %v1209
        %v1213 = vperm.slane %v1005, 0
        %v1215 = vadd.f32 %v1211, %v1213
        %s1216 = scalar_lea.vmem %s8, 1
        %v1217 = vld [vmem:[%s1216] sm:$0x1]
        %s1218 = scalar_lea.vmem %s9, 1
        %v1219 = vld [vmem:[%s1218] sm:$0x1]
        %v1220 = vsel %vm587, %v1215, 0.0
        %1221 = vadd.xlane.f32.xlu0 %v1220
        %v1222 = vpop.xlane.xlu0 %1221
        %v1223 = vmul.f32 %v1222, %v597
        %v1224 = vsub.f32 %v1215, %v1223
        %v1225 = vmul.f32 %v1224, %v1224
        %v1226 = vsel %vm587, %v1225, 0.0
        %1227 = vadd.xlane.f32.xlu0 %v1226
        %v1228 = vpop.xlane.xlu0 %1227
        %v1229 = vmul.f32 %v1228, %v597
        %v1230 = vadd.f32 %v1229, 1e-05
        %v1231 = vrsqrt.pop %v1230
        %v1232 = vmul.f32 %v1231, %v1230
        %v1233 = vmul.f32 %v1232, %v1231
        %v1234 = vmul.f32 0.5, %v1233
        %v1235 = vsub.f32 1.5, %v1234
        %v1236 = vmul.f32 %v1231, %v1235
        %vm1237 = vweird.f32 %v1230
        %vm1238 = vweird.f32 %v1231
        %vm1239 = vmor %vm1237, %vm1238
        %v1240 = vsel %vm1239, %v1231, %v1236
        %v1241 = vmul.f32 %v1224, %v1240
        %v1243 = vperm.slane %v1217, 0
        %v1245 = vmul.f32 %v1241, %v1243
        %v1247 = vperm.slane %v1219, 0
        %v1249 = vadd.f32 %v1245, %v1247
        %s1250 = scalar_lea.vmem %s10, 32
        %v1251 = vld [vmem:[%s1250] sm:$0xff]
        %v1252 = vld [vmem:[%s1250 + $0x8] sm:$0xff]
        %v1253 = vld [vmem:[%s1250 + $0x10] sm:$0xff]
        %v1254 = vld [vmem:[%s1250 + $0x18] sm:$0xff]
        %s1255 = scalar_lea.vmem %s11, 1
        %v1256 = vld [vmem:[%s1255] sm:$0x1]
        %v1258 = vperm.slane %v1256, 0
        %v1261 = vsel %vm587, %v1249, 0
        %1263 = vmatpush.msra.mxu0 0.0
        %1264 = vmatpush.msra.mxu0 0.0
        %1265 = vmatpush.msra.mxu0 0.0
        %1266 = vmatpush.msra.mxu0 0.0
        %1267 = vmatpush.msra.mxu0 0.0
        %1268 = vmatpush.msra.mxu0 0.0
        %1269 = vmatpush.msra.mxu0 0.0
        %1270 = vmatpush.msra.mxu0 0.0
        %1271 = vmatpush.msra.mxu0 0.0
        %1272 = vmatpush.msra.mxu0 0.0
        %1273 = vmatpush.msra.mxu0 0.0
        %1274 = vmatpush.msra.mxu0 0.0
        %1275 = vmatpush.msra.mxu0 %v1254
        %1276 = vmatpush.msra.mxu0 %v1253
        %1277 = vmatpush.msra.mxu0 %v1252
        %1278 = vmatpush.msra.mxu0 %v1251
        %1279 = vmatmul.f32.gmra.mxu0 %v1261
        %v1280 = vpop.f32.mrf.mxu0
        %v1281 = vadd.f32 %v1258, %v1280
        %1282 = vdwg.mxu0
        %v1283 = vmul.f32 %v1281, %v1281
        %v1284 = vmul.f32 %v1281, %v1283
        %v1285 = vmul.f32 %v1284, 0.044715
        %v1286 = vadd.f32 %v1281, %v1285
        %v1287 = vmul.f32 %v1286, 0.7978846
        %v1288 = vtanh.pop %v1287
        %v1289 = vadd.f32 %v1288, 1.0
        %v1290 = vmul.f32 %v1289, 0.5
        %v1291 = vmul.f32 %v1281, %v1290
        %s1292 = scalar_lea.vmem %s12, 64
        %v1293 = vld [vmem:[%s1292] sm:$0xff]
        %v1294 = vld [vmem:[%s1292 + $0x8] sm:$0xff]
        %v1295 = vld [vmem:[%s1292 + $0x10] sm:$0xff]
        %v1296 = vld [vmem:[%s1292 + $0x18] sm:$0xff]
        %v1297 = vld [vmem:[%s1292 + $0x20] sm:$0xff]
        %v1298 = vld [vmem:[%s1292 + $0x28] sm:$0xff]
        %v1299 = vld [vmem:[%s1292 + $0x30] sm:$0xff]
        %v1300 = vld [vmem:[%s1292 + $0x38] sm:$0xff]
        %s1301 = scalar_lea.vmem %s13, 1
        %v1302 = vld [vmem:[%s1301] sm:$0x1]
        %v1304 = vperm.slane %v1302, 0
        %v1307 = vsel %vm935, %v1291, 0
        %1309 = vmatpush.msra.mxu0 0.0
        %1310 = vmatpush.msra.mxu0 0.0
        %1311 = vmatpush.msra.mxu0 0.0
        %1312 = vmatpush.msra.mxu0 0.0
        %1313 = vmatpush.msra.mxu0 0.0
        %1314 = vmatpush.msra.mxu0 0.0
        %1315 = vmatpush.msra.mxu0 0.0
        %1316 = vmatpush.msra.mxu0 0.0
        %1317 = vmatpush.msra.mxu0 %v1300
        %1318 = vmatpush.msra.mxu0 %v1299
        %1319 = vmatpush.msra.mxu0 %v1298
        %1320 = vmatpush.msra.mxu0 %v1297
        %1321 = vmatpush.msra.mxu0 %v1296
        %1322 = vmatpush.msra.mxu0 %v1295
        %1323 = vmatpush.msra.mxu0 %v1294
        %1324 = vmatpush.msra.mxu0 %v1293
        %1325 = vmatmul.f32.gmra.mxu0 %v1307
        %v1326 = vpop.f32.mrf.mxu0
        %v1327 = vadd.f32 %v1304, %v1326
        %1328 = vdwg.mxu0
        %v1329 = vadd.f32 %v1249, %v1327
        %s1330 = scalar_lea.vmem %s14, 1
        %v1331 = vld [vmem:[%s1330] sm:$0x1]
        %s1332 = scalar_lea.vmem %s15, 1
        %v1333 = vld [vmem:[%s1332] sm:$0x1]
        %v1334 = vsel %vm587, %v1329, 0.0
        %1335 = vadd.xlane.f32.xlu0 %v1334
        %v1336 = vpop.xlane.xlu0 %1335
        %v1337 = vmul.f32 %v1336, %v597
        %v1338 = vsub.f32 %v1329, %v1337
        %v1339 = vmul.f32 %v1338, %v1338
        %v1340 = vsel %vm587, %v1339, 0.0
        %1341 = vadd.xlane.f32.xlu0 %v1340
        %v1342 = vpop.xlane.xlu0 %1341
        %v1343 = vmul.f32 %v1342, %v597
        %v1344 = vadd.f32 %v1343, 1e-05
        %v1345 = vrsqrt.pop %v1344
        %v1346 = vmul.f32 %v1345, %v1344
        %v1347 = vmul.f32 %v1346, %v1345
        %v1348 = vmul.f32 0.5, %v1347
        %v1349 = vsub.f32 1.5, %v1348
        %v1350 = vmul.f32 %v1345, %v1349
        %vm1351 = vweird.f32 %v1344
        %vm1352 = vweird.f32 %v1345
        %vm1353 = vmor %vm1351, %vm1352
        %v1354 = vsel %vm1353, %v1345, %v1350
        %v1355 = vmul.f32 %v1338, %v1354
        %v1357 = vperm.slane %v1331, 0
        %v1359 = vmul.f32 %v1355, %v1357
        %v1361 = vperm.slane %v1333, 0
        %v1363 = vadd.f32 %v1359, %v1361
        %v1364 = vld [vmem:[%s16] sm:$0xff]
        %v1365 = vld [vmem:[%s16 + $0x8] sm:$0xff]
        %v1366 = vld [vmem:[%s16 + $0x10] sm:$0xff]
        %v1367 = vld [vmem:[%s16 + $0x18] sm:$0xff]
        %v1368 = vld [vmem:[%s17] sm:$0x1]
        %v1370 = vsel %vm587, %v1363, 0
        %1372 = vmatpush.msra.mxu0 0.0
        %1373 = vmatpush.msra.mxu0 0.0
        %1374 = vmatpush.msra.mxu0 0.0
        %1375 = vmatpush.msra.mxu0 0.0
        %1376 = vmatpush.msra.mxu0 0.0
        %1377 = vmatpush.msra.mxu0 0.0
        %1378 = vmatpush.msra.mxu0 0.0
        %1379 = vmatpush.msra.mxu0 0.0
        %1380 = vmatpush.msra.mxu0 0.0
        %1381 = vmatpush.msra.mxu0 0.0
        %1382 = vmatpush.msra.mxu0 0.0
        %1383 = vmatpush.msra.mxu0 0.0
        %1384 = vmatpush.msra.mxu0 %v1367
        %1385 = vmatpush.msra.mxu0 %v1366
        %1386 = vmatpush.msra.mxu0 %v1365
        %1387 = vmatpush.msra.mxu0 %v1364
        %1388 = vmatmul.f32.gmra.mxu0 %v1370
        %v1389 = vpop.f32.mrf.mxu0
        %v1390 = vadd.f32 %v1368, %v1389
        %1391 = vdwg.mxu0
        %v1392 = vtanh.pop %v1390
        %1393 = vst [vmem:[%s576] sm:$0x1] %v1392
        %s1394 = sand.u32 %s428, 1
        %s1395 = scalar_lea.sflag [#allocation3], %s1394
        %s1396 = sand.u32 %s428, 1
        %s1397 = scalar_lea.vmem [#allocation2], %s1396
        // Predicated region
        $region93: #{_encode_impl.1} parent=91 // pred_check
          %p1398 = pneg %p438
        $region94: #{_encode_impl.1} parent=91 // pred_check_branch
          %1400 = sbr.rel (%p1398) target = $region96
        $region95: #{_encode_impl.1} parent=91 // pred_region
          %1402 = vsyncadd %s1395, 0
          %s1403 = scalar_lea.hbm %s18, %s32
          %s1405 = sshll.u32 %s1397, 4
          %s1406 = int_to_ptr.vmem [resolvable:$true] %s1405
          %s1407 = sshll.u32 %s1403, 4
          %s1408 = int_to_ptr.hbm [resolvable:$true] %s1407
          %1410 = dma.vmem_to_hbm [thread:$0]  %s1406, 16, %s1408, %s1395
        $region96: #{_encode_impl.1} parent=91 // pred_fallthru
          _
      $region92: #{_encode_impl.1} parent=5 // pred_fallthru
        _
      %p1411 = scmp.le.s32.totalorder 2, %s27
      // Predicated region
      $region97: #{_encode_impl.1} parent=5 // pred_check
        %p1412 = pneg %p1411
      $region98: #{_encode_impl.1} parent=5 // pred_check_branch
        %1414 = sbr.rel (%p1412) target = $region100
      $region99: #{_encode_impl.1} parent=5 // pred_region
        %s1415 = ssub.s32 %s27, 2
        // Predicated region
        $region101: #{_encode_impl.1} parent=99 // pred_check
          %p1416 = pneg %p444
        $region102: #{_encode_impl.1} parent=99 // pred_check_branch
          %1418 = sbr.rel (%p1416) target = $region104
        $region103: #{_encode_impl.1} parent=99 // pred_region
          %s1419 = sand.u32 %s429, 1
          %s1420 = scalar_lea.sflag [#allocation3], %s1419
          %s1421 = sand.u32 %s429, 1
          %s1422 = scalar_lea.vmem [#allocation2], %s1421
          %1424 = dma.done %s1420, 16
        $region104: #{_encode_impl.1} parent=99 // pred_fallthru
          _
      $region100: #{_encode_impl.1} parent=5 // pred_fallthru
        _
    $region6: #{_encode_impl.1} parent=1 // loop_footer
      %s31 = sadd.s32 1, %s27
    $region7: #{_encode_impl.1} parent=1 // loop_footer_branch
      %26 = sbr.rel target = $region3
    $region8: #{_encode_impl.1} parent=1 // loop_exit
      _
    %1425 = vsyncpa [#allocation3], 1
    %s1426 = scalar_lea.sflag [#allocation3], 1
    %1427 = vsyncpa %s1426, 1

</llo_original>
